<compile_context>
chip_gen: v7x
topology: tpu7x:2x2x1
jax: 0.10.0
libtpu: 0.0.40
codegen_flags: <defaults>
</compile_context>

<pallas_src>
import jax
import jax.numpy as jnp
from jax.experimental import pallas as pl
from jax.experimental.pallas import tpu as pltpu


def make_inception_kernel(H, W, Cin, c1, c2, c3, c4, pad):
    """Builds the kernel closed over static (already 8-padded) channel counts.

    pad: lane padding on each side of the flattened spatial axis; must be
         >= 2*W + 2 (largest flat offset of a 5x5 tap). A padded scratch buffer
         handles vertical (dy) out-of-range taps; horizontal (dx) wrap-around is
         masked with per-column masks.
    """
    HW = H * W
    c2_0, c2_1 = c2
    c3_0, c3_1 = c3

    def kernel(x_ref, wf_ref, bf_ref, w2m_ref, b2b_ref, w3m_ref, b3b_ref,
               w4m_ref, b4_ref, out_ref,
               pad2_ref, pad3_ref, pad4_ref, col2_ref, col3_ref):
        x = x_ref[0]                                        # (Cin, HW) f32, lane-dense
        xb = x.astype(jnp.bfloat16)                         # matmul operand

        # Column-validity masks for horizontal taps (dy handled by the pad rows).
        xx = jax.lax.broadcasted_iota(jnp.int32, (1, HW), 1) % W
        col_ok = {dx: (xx + dx >= 0) & (xx + dx < W) for dx in (-2, -1, 1, 2)}

        # Refresh only the pad regions (2 x `pad` lanes per buffer) each step.
        # (Init-once under pl.program_id(0)==0 is NOT safe here: with a
        # "parallel" grid axis the second TensorCore gets its own scratch and
        # never sees program_id 0. These few aligned 128-lane stores are cheap.)
        pad2_ref[:, 0:pad] = jnp.zeros((c2_0, pad), jnp.bfloat16)
        pad2_ref[:, pad + HW:] = jnp.zeros((c2_0, pad), jnp.bfloat16)
        pad3_ref[:, 0:pad] = jnp.zeros((c3_0, pad), jnp.bfloat16)
        pad3_ref[:, pad + HW:] = jnp.zeros((c3_0, pad), jnp.bfloat16)
        pad4_ref[:, 0:pad] = jnp.full((Cin, pad), -jnp.inf, jnp.float32)
        pad4_ref[:, pad + HW:] = jnp.full((Cin, pad), -jnp.inf, jnp.float32)

        # ---- fused 1x1 convs for branches 1 / 2 / 3: one MXU matmul ----------
        hf = (jnp.dot(wf_ref[...], xb, preferred_element_type=jnp.float32)
              + bf_ref[...])                                # (c1+c2_0+c3_0, HW) f32
        out_ref[0, 0:c1, :] = hf[0:c1]                      # p1: 1x1 conv, NO ReLU
        pad2_ref[:, pad:pad + HW] = jnp.maximum(
            hf[c1:c1 + c2_0], 0.0).astype(jnp.bfloat16)                         # h2
        pad3_ref[:, pad:pad + HW] = jnp.maximum(
            hf[c1 + c2_0:c1 + c2_0 + c3_0], 0.0).astype(jnp.bfloat16)           # h3
        pad4_ref[:, pad:pad + HW] = x                       # maxpool input (f32)

        def window(pad_ref, dy, dx, fill):
            # Shifted spatial window read from the lane-padded flat buffer.
            start = pad + dy * W + dx                       # static offset
            win = pad_ref[:, start:start + HW]
            if dx == 0:
                return win                                  # dy OOB -> pad fill
            return jnp.where(col_ok[dx], win, fill)         # mask x wrap-around

        # ---- branch 2: 3x3 conv (pad=1) via im2col + one fat bf16 matmul -----
        t = 0
        for dy in range(-1, 2):
            for dx in range(-1, 2):
                col2_ref[t * c2_0:(t + 1) * c2_0, :] = window(pad2_ref, dy, dx, 0.0)
                t += 1
        p2 = jnp.maximum(
            jnp.dot(w2m_ref[...], col2_ref[...],
                    preferred_element_type=jnp.float32) + b2b_ref[...], 0.0)
        out_ref[0, c1:c1 + c2_1, :] = p2

        # ---- branch 3: 5x5 conv (pad=2) via im2col + one fat bf16 matmul -----
        t = 0
        for dy in range(-2, 3):
            for dx in range(-2, 3):
                col3_ref[t * c3_0:(t + 1) * c3_0, :] = window(pad3_ref, dy, dx, 0.0)
                t += 1
        p3 = jnp.maximum(
            jnp.dot(w3m_ref[...], col3_ref[...],
                    preferred_element_type=jnp.float32) + b3b_ref[...], 0.0)
        out_ref[0, c1 + c2_1:c1 + c2_1 + c3_1, :] = p3

        # ---- branch 4: separable 3x3 maxpool (stride=1, pad=1) -> 1x1 + ReLU -
        # Horizontal pass (dx in {-1,0,1}) with column masks, then write the
        # intermediate back into the padded buffer so the vertical pass picks up
        # -inf padding for out-of-range rows.
        hmax = jnp.maximum(
            x, jnp.maximum(window(pad4_ref, 0, -1, -jnp.inf),
                           window(pad4_ref, 0, 1, -jnp.inf)))
        pad4_ref[:, pad:pad + HW] = hmax
        pooled = jnp.maximum(
            hmax, jnp.maximum(window(pad4_ref, -1, 0, -jnp.inf),
                              window(pad4_ref, 1, 0, -jnp.inf)))
        p4 = jnp.maximum(
            jnp.dot(w4m_ref[...], pooled.astype(jnp.bfloat16),
                    preferred_element_type=jnp.float32) + b4_ref[...], 0.0)
        out_ref[0, c1 + c2_1 + c3_1:, :] = p4

    return kernel


def _round8(v):
    return ((v + 7) // 8) * 8


def _pad_axis(a, axis, target):
    if a.shape[axis] == target:
        return a
    widths = [(0, 0)] * a.ndim
    widths[axis] = (0, target - a.shape[axis])
    return jnp.pad(a, widths)


def _vmem_bytes(shape, dtype):
    """Rough per-buffer VMEM footprint with (8,128) tile padding."""
    s = list(shape)
    if len(s) >= 1:
        s[-1] = ((s[-1] + 127) // 128) * 128
    if len(s) >= 2:
        s[-2] = ((s[-2] + 7) // 8) * 8
    n = 1
    for d in s:
        n *= int(d)
    itemsize = 2 if dtype == jnp.bfloat16 else 4
    return n * itemsize


@jax.jit
def inception_forward(x_nchw, params):
    """x_nchw: (N, Cin, H, W) float32.  params: PyTorch-layout weights/biases."""
    N, Cin, H, W = x_nchw.shape
    HW = H * W
    x = x_nchw.reshape(N, Cin, HW).astype(jnp.float32)      # contiguous, no transpose

    (w1, b1, w2a, b2a, w2b, b2b, w3a, b3a, w3b, b3b, w4, b4) = params
    c1 = w1.shape[0]
    c2_0, c2_1 = w2a.shape[0], w2b.shape[0]
    c3_0, c3_1 = w3a.shape[0], w3b.shape[0]
    c4 = w4.shape[0]
    c_out = c1 + c2_1 + c3_1 + c4

    # Sublane-align every branch channel count (padded rows are exact zeros).
    c1p, c2_0p, c2_1p = _round8(c1), _round8(c2_0), _round8(c2_1)
    c3_0p, c3_1p, c4p = _round8(c3_0), _round8(c3_1), _round8(c4)
    c_out_p = c1p + c2_1p + c3_1p + c4p

    # One-time weight re-layout (wrapper side, fused by XLA):
    #   fused 1x1:   (c1p + c2_0p + c3_0p, Cin)  bf16
    #   kxk convs:   (Cout_p, k*k*Cin_branch_p)  bf16, tap-major im2col order
    #   biases:      (Cout_p, 1) f32 columns, broadcast along the lane axis
    wf = jnp.concatenate([_pad_axis(w1.reshape(c1, Cin), 0, c1p),
                          _pad_axis(w2a.reshape(c2_0, Cin), 0, c2_0p),
                          _pad_axis(w3a.reshape(c3_0, Cin), 0, c3_0p)],
                         axis=0).astype(jnp.bfloat16)
    bf = jnp.concatenate([_pad_axis(b1, 0, c1p),
                          _pad_axis(b2a, 0, c2_0p),
                          _pad_axis(b3a, 0, c3_0p)], axis=0).reshape(-1, 1)
    w2bp = _pad_axis(_pad_axis(w2b, 0, c2_1p), 1, c2_0p)
    w2m = jnp.transpose(w2bp, (0, 2, 3, 1)).reshape(c2_1p, 9 * c2_0p).astype(jnp.bfloat16)
    w3bp = _pad_axis(_pad_axis(w3b, 0, c3_1p), 1, c3_0p)
    w3m = jnp.transpose(w3bp, (0, 2, 3, 1)).reshape(c3_1p, 25 * c3_0p).astype(jnp.bfloat16)
    w4m = _pad_axis(w4.reshape(c4, Cin), 0, c4p).astype(jnp.bfloat16)
    b2bp = _pad_axis(b2b, 0, c2_1p).reshape(-1, 1)
    b3bp = _pad_axis(b3b, 0, c3_1p).reshape(-1, 1)
    b4p = _pad_axis(b4, 0, c4p).reshape(-1, 1)
    kparams = (wf, bf, w2m, b2bp, w3m, b3bp, w4m, b4p)

    pad = ((2 * W + 2 + 127) // 128) * 128                  # lane-aligned halo

    scratch_shapes = [
        pltpu.VMEM((c2_0p, 2 * pad + HW), jnp.bfloat16),     # zero-padded h2 (3x3)
        pltpu.VMEM((c3_0p, 2 * pad + HW), jnp.bfloat16),     # zero-padded h3 (5x5)
        pltpu.VMEM((Cin, 2 * pad + HW), jnp.float32),        # -inf-padded x (maxpool)
        pltpu.VMEM((9 * c2_0p, HW), jnp.bfloat16),           # im2col block, 3x3
        pltpu.VMEM((25 * c3_0p, HW), jnp.bfloat16),          # im2col block, 5x5
    ]

    # Explicit VMEM budget: scratch (single) + double-buffered I/O blocks +
    # double-buffered weights, plus margin for compiler-internal scratch.
    vmem_limit = (
        _vmem_bytes((c2_0p, 2 * pad + HW), jnp.bfloat16)
        + _vmem_bytes((c3_0p, 2 * pad + HW), jnp.bfloat16)
        + _vmem_bytes((Cin, 2 * pad + HW), jnp.float32)
        + _vmem_bytes((9 * c2_0p, HW), jnp.bfloat16)
        + _vmem_bytes((25 * c3_0p, HW), jnp.bfloat16)
        + 2 * (_vmem_bytes((Cin, HW), jnp.float32)
               + _vmem_bytes((c_out_p, HW), jnp.float32))
        + 2 * sum(_vmem_bytes(a.shape, a.dtype) for a in kparams)
        + (8 << 20))
    vmem_limit = int(min(vmem_limit, 100 << 20))

    def full_spec(a):
        return pl.BlockSpec(a.shape, lambda n, _nd=a.ndim: (0,) * _nd)

    grid_spec = pltpu.PrefetchScalarGridSpec(
        num_scalar_prefetch=0,
        grid=(N,),
        in_specs=[pl.BlockSpec((1, Cin, HW), lambda n: (n, 0, 0))]
                 + [full_spec(a) for a in kparams],
        out_specs=pl.BlockSpec((1, c_out_p, HW), lambda n: (n, 0, 0)),
        scratch_shapes=scratch_shapes,
    )

    kernel = make_inception_kernel(H, W, Cin, c1p, (c2_0p, c2_1p),
                                   (c3_0p, c3_1p), c4p, pad)

    out = pl.pallas_call(
        kernel,
        out_shape=jax.ShapeDtypeStruct((N, c_out_p, HW), jnp.float32),
        grid_spec=grid_spec,
        compiler_params=pltpu.CompilerParams(
            dimension_semantics=("parallel",),               # batch across TCs on v7x
            vmem_limit_bytes=vmem_limit),
    )(x, *kparams)

    # Drop zero-padded channel rows (no-op when counts are already x8).
    if (c1p, c2_1p, c3_1p, c4p) == (c1, c2_1, c3_1, c4):
        out_real = out
    else:
        offs = (0, c1p, c1p + c2_1p, c1p + c2_1p + c3_1p)
        sizes = (c1, c2_1, c3_1, c4)
        out_real = jnp.concatenate(
            [out[:, o:o + s] for o, s in zip(offs, sizes)], axis=1)

    return out_real.reshape(N, c_out, H, W)                  # NCHW, free reshape


def init_params(key, in_channels, c1, c2, c3, c4):
    """Deterministic synthetic parameters in PyTorch Conv2d layout:
       weights (Cout, Cin, kh, kw), biases (Cout,)."""
    ks = jax.random.split(key, 12)
    s = 0.1
    w1 = s * jax.random.normal(ks[0], (c1, in_channels, 1, 1), jnp.float32)
    b1 = s * jax.random.normal(ks[1], (c1,), jnp.float32)
    w2a = s * jax.random.normal(ks[2], (c2[0], in_channels, 1, 1), jnp.float32)
    b2a = s * jax.random.normal(ks[3], (c2[0],), jnp.float32)
    w2b = s * jax.random.normal(ks[4], (c2[1], c2[0], 3, 3), jnp.float32)
    b2b = s * jax.random.normal(ks[5], (c2[1],), jnp.float32)
    w3a = s * jax.random.normal(ks[6], (c3[0], in_channels, 1, 1), jnp.float32)
    b3a = s * jax.random.normal(ks[7], (c3[0],), jnp.float32)
    w3b = s * jax.random.normal(ks[8], (c3[1], c3[0], 5, 5), jnp.float32)
    b3b = s * jax.random.normal(ks[9], (c3[1],), jnp.float32)
    w4 = s * jax.random.normal(ks[10], (c4, in_channels, 1, 1), jnp.float32)
    b4 = s * jax.random.normal(ks[11], (c4,), jnp.float32)
    return (w1, b1, w2a, b2a, w2b, b2b, w3a, b3a, w3b, b3b, w4, b4)


def reference_forward(x, params):
    """Pure-JAX f32 reference mirroring the PyTorch Inception module."""
    (w1, b1, w2a, b2a, w2b, b2b, w3a, b3a, w3b, b3b, w4, b4) = params

    def conv(v, w, b, p):
        y = jax.lax.conv_general_dilated(
            v, w, window_strides=(1, 1), padding=[(p, p), (p, p)],
            dimension_numbers=("NCHW", "OIHW", "NCHW"),
            precision=jax.lax.Precision.HIGHEST)
        return y + b.reshape(1, -1, 1, 1)

    relu = lambda v: jnp.maximum(v, 0.0)
    p1 = conv(x, w1, b1, 0)
    p2 = relu(conv(relu(conv(x, w2a, b2a, 0)), w2b, b2b, 1))
    p3 = relu(conv(relu(conv(x, w3a, b3a, 0)), w3b, b3b, 2))
    pooled = jax.lax.reduce_window(
        x, -jnp.inf, jax.lax.max,
        window_dimensions=(1, 1, 3, 3), window_strides=(1, 1, 1, 1),
        padding=[(0, 0), (0, 0), (1, 1), (1, 1)])
    p4 = relu(conv(pooled, w4, b4, 0))
    return jnp.concatenate([p1, p2, p3, p4], axis=1)


if __name__ == "__main__":
    key = jax.random.PRNGKey(0)
    k_x, k_p = jax.random.split(key)

    # Small shapes consistent with the module: batch=2, in_channels=4, 16x16 spatial.
    N, Cin, H, W = 2, 4, 16, 16
    c1, c2, c3, c4 = 4, (4, 8), (2, 4), 4

    x = jax.random.normal(k_x, (N, Cin, H, W), jnp.float32)   # PyTorch-style NCHW
    params = init_params(k_p, Cin, c1, c2, c3, c4)

    out = jax.block_until_ready(inception_forward(x, params))

    expected_channels = c1 + c2[1] + c3[1] + c4
    assert out.shape == (N, expected_channels, H, W), out.shape
    assert bool(jnp.all(jnp.isfinite(out)))

    # bf16 matmul operands (f32 accumulation) vs an f32 HIGHEST-precision
    # reference -> loosened tolerance per the perf review.
    ref = jax.block_until_ready(reference_forward(x, params))
    max_err = float(jnp.max(jnp.abs(out - ref)))
    assert bool(jnp.allclose(out, ref, rtol=2e-2, atol=2e-2)), max_err

    print("KERNEL_OK")
</pallas_src>

<mosaic_0001>
module attributes {stable_mosaic.version = 11 : i64} {
  func.func @kernel(%arg0: i32, %arg1: memref<1x4x256xf32, #tpu.memory_space<vmem>>, %arg2: memref<24x4xbf16, #tpu.memory_space<vmem>>, %arg3: memref<24x1xf32, #tpu.memory_space<vmem>>, %arg4: memref<8x72xbf16, #tpu.memory_space<vmem>>, %arg5: memref<8x1xf32, #tpu.memory_space<vmem>>, %arg6: memref<8x200xbf16, #tpu.memory_space<vmem>>, %arg7: memref<8x1xf32, #tpu.memory_space<vmem>>, %arg8: memref<8x4xbf16, #tpu.memory_space<vmem>>, %arg9: memref<8x1xf32, #tpu.memory_space<vmem>>, %arg10: memref<1x32x256xf32, #tpu.memory_space<vmem>>, %arg11: memref<8x512xbf16, #tpu.memory_space<vmem>>, %arg12: memref<8x512xbf16, #tpu.memory_space<vmem>>, %arg13: memref<4x512xf32, #tpu.memory_space<vmem>>, %arg14: memref<72x256xbf16, #tpu.memory_space<vmem>>, %arg15: memref<200x256xbf16, #tpu.memory_space<vmem>>) attributes {dimension_semantics = [#tpu.dimension_semantics<parallel>], iteration_bounds = array<i64: 2>, scalar_prefetch = 0 : i64, scratch_operands = 5 : i64, tpu.core_type = #tpu.core_type<tc>, window_params = [{transform_indices = @transform_0, window_bounds = array<i64: 1, 4, 256>}, {pipeline_mode = #tpu.pipeline_mode<synchronous>, transform_indices = @transform_1, window_bounds = array<i64: 24, 4>}, {pipeline_mode = #tpu.pipeline_mode<synchronous>, transform_indices = @transform_2, window_bounds = array<i64: 24, 1>}, {pipeline_mode = #tpu.pipeline_mode<synchronous>, transform_indices = @transform_3, window_bounds = array<i64: 8, 72>}, {pipeline_mode = #tpu.pipeline_mode<synchronous>, transform_indices = @transform_4, window_bounds = array<i64: 8, 1>}, {pipeline_mode = #tpu.pipeline_mode<synchronous>, transform_indices = @transform_5, window_bounds = array<i64: 8, 200>}, {pipeline_mode = #tpu.pipeline_mode<synchronous>, transform_indices = @transform_6, window_bounds = array<i64: 8, 1>}, {pipeline_mode = #tpu.pipeline_mode<synchronous>, transform_indices = @transform_7, window_bounds = array<i64: 8, 4>}, {pipeline_mode = #tpu.pipeline_mode<synchronous>, transform_indices = @transform_8, window_bounds = array<i64: 8, 1>}, {transform_indices = @transform_9, window_bounds = array<i64: 1, 32, 256>}]} {
    %c0 = arith.constant 0 : index
    %c0_0 = arith.constant 0 : index
    %c0_1 = arith.constant 0 : index
    %0 = vector.load %arg1[%c0, %c0_0, %c0_1] : memref<1x4x256xf32, #tpu.memory_space<vmem>>, vector<1x4x256xf32>
    %1 = vector.shape_cast %0 : vector<1x4x256xf32> to vector<4x256xf32>
    %2 = arith.truncf %1 : vector<4x256xf32> to vector<4x256xbf16>
    %3 = tpu.iota {dimensions = array<i32: 1>} : vector<1x256xi32>
    %c16_i32 = arith.constant 16 : i32
    %c0_i32 = arith.constant 0 : i32
    %4 = arith.cmpi eq, %c16_i32, %c0_i32 : i32
    %c1_i32 = arith.constant 1 : i32
    %5 = arith.select %4, %c1_i32, %c16_i32 : i32
    %6 = vector.broadcast %5 : i32 to vector<1x256xi32>
    %7 = arith.remsi %3, %6 : vector<1x256xi32>
    %c0_i32_2 = arith.constant 0 : i32
    %8 = vector.broadcast %c0_i32_2 : i32 to vector<1x256xi32>
    %9 = arith.cmpi ne, %7, %8 : vector<1x256xi32>
    %c0_i32_3 = arith.constant 0 : i32
    %10 = vector.broadcast %c0_i32_3 : i32 to vector<1x256xi32>
    %11 = arith.cmpi slt, %7, %10 : vector<1x256xi32>
    %c0_i32_4 = arith.constant 0 : i32
    %12 = arith.cmpi slt, %5, %c0_i32_4 : i32
    %13 = vector.broadcast %12 : i1 to vector<1x256xi1>
    %14 = vector.broadcast %13 : vector<1x256xi1> to vector<1x256xi1>
    %15 = arith.xori %11, %14 : vector<1x256xi1>
    %16 = arith.andi %15, %9 : vector<1x256xi1>
    %17 = vector.broadcast %5 : i32 to vector<1x256xi32>
    %18 = arith.addi %7, %17 : vector<1x256xi32>
    %19 = arith.select %16, %18, %7 : vector<1x256xi1>, vector<1x256xi32>
    %c-2_i32 = arith.constant -2 : i32
    %20 = vector.broadcast %c-2_i32 : i32 to vector<1x256xi32>
    %21 = arith.addi %19, %20 : vector<1x256xi32>
    %c0_i32_5 = arith.constant 0 : i32
    %22 = vector.broadcast %c0_i32_5 : i32 to vector<1x256xi32>
    %23 = arith.cmpi sge, %21, %22 : vector<1x256xi32>
    %c-2_i32_6 = arith.constant -2 : i32
    %24 = vector.broadcast %c-2_i32_6 : i32 to vector<1x256xi32>
    %25 = arith.addi %19, %24 : vector<1x256xi32>
    %c16_i32_7 = arith.constant 16 : i32
    %26 = vector.broadcast %c16_i32_7 : i32 to vector<1x256xi32>
    %27 = arith.cmpi slt, %25, %26 : vector<1x256xi32>
    %28 = arith.andi %23, %27 : vector<1x256xi1>
    %c-1_i32 = arith.constant -1 : i32
    %29 = vector.broadcast %c-1_i32 : i32 to vector<1x256xi32>
    %30 = arith.addi %19, %29 : vector<1x256xi32>
    %c0_i32_8 = arith.constant 0 : i32
    %31 = vector.broadcast %c0_i32_8 : i32 to vector<1x256xi32>
    %32 = arith.cmpi sge, %30, %31 : vector<1x256xi32>
    %c-1_i32_9 = arith.constant -1 : i32
    %33 = vector.broadcast %c-1_i32_9 : i32 to vector<1x256xi32>
    %34 = arith.addi %19, %33 : vector<1x256xi32>
    %c16_i32_10 = arith.constant 16 : i32
    %35 = vector.broadcast %c16_i32_10 : i32 to vector<1x256xi32>
    %36 = arith.cmpi slt, %34, %35 : vector<1x256xi32>
    %37 = arith.andi %32, %36 : vector<1x256xi1>
    %c1_i32_11 = arith.constant 1 : i32
    %38 = vector.broadcast %c1_i32_11 : i32 to vector<1x256xi32>
    %39 = arith.addi %19, %38 : vector<1x256xi32>
    %c0_i32_12 = arith.constant 0 : i32
    %40 = vector.broadcast %c0_i32_12 : i32 to vector<1x256xi32>
    %41 = arith.cmpi sge, %39, %40 : vector<1x256xi32>
    %c1_i32_13 = arith.constant 1 : i32
    %42 = vector.broadcast %c1_i32_13 : i32 to vector<1x256xi32>
    %43 = arith.addi %19, %42 : vector<1x256xi32>
    %c16_i32_14 = arith.constant 16 : i32
    %44 = vector.broadcast %c16_i32_14 : i32 to vector<1x256xi32>
    %45 = arith.cmpi slt, %43, %44 : vector<1x256xi32>
    %46 = arith.andi %41, %45 : vector<1x256xi1>
    %c2_i32 = arith.constant 2 : i32
    %47 = vector.broadcast %c2_i32 : i32 to vector<1x256xi32>
    %48 = arith.addi %19, %47 : vector<1x256xi32>
    %c0_i32_15 = arith.constant 0 : i32
    %49 = vector.broadcast %c0_i32_15 : i32 to vector<1x256xi32>
    %50 = arith.cmpi sge, %48, %49 : vector<1x256xi32>
    %c2_i32_16 = arith.constant 2 : i32
    %51 = vector.broadcast %c2_i32_16 : i32 to vector<1x256xi32>
    %52 = arith.addi %19, %51 : vector<1x256xi32>
    %c16_i32_17 = arith.constant 16 : i32
    %53 = vector.broadcast %c16_i32_17 : i32 to vector<1x256xi32>
    %54 = arith.cmpi slt, %52, %53 : vector<1x256xi32>
    %55 = arith.andi %50, %54 : vector<1x256xi1>
    %cst = arith.constant 0.000000e+00 : bf16
    %56 = vector.broadcast %cst : bf16 to vector<8x128xbf16>
    %c0_18 = arith.constant 0 : index
    %c0_19 = arith.constant 0 : index
    %57 = vector.load %arg11[%c0_18, %c0_19] : memref<8x512xbf16, #tpu.memory_space<vmem>>, vector<8x128xbf16>
    tpu.vector_store %arg11[%c0_18, %c0_19], %56 {strides = array<i32>} : memref<8x512xbf16, #tpu.memory_space<vmem>>, vector<8x128xbf16>,
    %cst_20 = arith.constant 0.000000e+00 : bf16
    %58 = vector.broadcast %cst_20 : bf16 to vector<8x128xbf16>
    %c0_21 = arith.constant 0 : index
    %c384 = arith.constant 384 : index
    %59 = vector.load %arg11[%c0_21, %c384] : memref<8x512xbf16, #tpu.memory_space<vmem>>, vector<8x128xbf16>
    tpu.vector_store %arg11[%c0_21, %c384], %58 {strides = array<i32>} : memref<8x512xbf16, #tpu.memory_space<vmem>>, vector<8x128xbf16>,
    %cst_22 = arith.constant 0.000000e+00 : bf16
    %60 = vector.broadcast %cst_22 : bf16 to vector<8x128xbf16>
    %c0_23 = arith.constant 0 : index
    %c0_24 = arith.constant 0 : index
    %61 = vector.load %arg12[%c0_23, %c0_24] : memref<8x512xbf16, #tpu.memory_space<vmem>>, vector<8x128xbf16>
    tpu.vector_store %arg12[%c0_23, %c0_24], %60 {strides = array<i32>} : memref<8x512xbf16, #tpu.memory_space<vmem>>, vector<8x128xbf16>,
    %cst_25 = arith.constant 0.000000e+00 : bf16
    %62 = vector.broadcast %cst_25 : bf16 to vector<8x128xbf16>
    %c0_26 = arith.constant 0 : index
    %c384_27 = arith.constant 384 : index
    %63 = vector.load %arg12[%c0_26, %c384_27] : memref<8x512xbf16, #tpu.memory_space<vmem>>, vector<8x128xbf16>
    tpu.vector_store %arg12[%c0_26, %c384_27], %62 {strides = array<i32>} : memref<8x512xbf16, #tpu.memory_space<vmem>>, vector<8x128xbf16>,
    %cst_28 = arith.constant 0xFF800000 : f32
    %64 = vector.broadcast %cst_28 : f32 to vector<4x128xf32>
    %c0_29 = arith.constant 0 : index
    %c0_30 = arith.constant 0 : index
    %65 = vector.load %arg13[%c0_29, %c0_30] : memref<4x512xf32, #tpu.memory_space<vmem>>, vector<4x128xf32>
    tpu.vector_store %arg13[%c0_29, %c0_30], %64 {strides = array<i32>} : memref<4x512xf32, #tpu.memory_space<vmem>>, vector<4x128xf32>,
    %cst_31 = arith.constant 0xFF800000 : f32
    %66 = vector.broadcast %cst_31 : f32 to vector<4x128xf32>
    %c0_32 = arith.constant 0 : index
    %c384_33 = arith.constant 384 : index
    %67 = vector.load %arg13[%c0_32, %c384_33] : memref<4x512xf32, #tpu.memory_space<vmem>>, vector<4x128xf32>
    tpu.vector_store %arg13[%c0_32, %c384_33], %66 {strides = array<i32>} : memref<4x512xf32, #tpu.memory_space<vmem>>, vector<4x128xf32>,
    %c0_34 = arith.constant 0 : index
    %c0_35 = arith.constant 0 : index
    %68 = vector.load %arg2[%c0_34, %c0_35] : memref<24x4xbf16, #tpu.memory_space<vmem>>, vector<24x4xbf16>
    %cst_36 = arith.constant dense<0.000000e+00> : vector<24x256xf32>
    %69 = tpu.matmul %68, %2, %cst_36 {dimension_numbers = #tpu.dot_dimension_numbers<[1], [0], [0], [1], [0, 0, 1, 1], [], []>} : vector<24x4xbf16>, vector<4x256xbf16>, vector<24x256xf32> -> vector<24x256xf32>
    %c0_37 = arith.constant 0 : index
    %c0_38 = arith.constant 0 : index
    %70 = vector.load %arg3[%c0_37, %c0_38] : memref<24x1xf32, #tpu.memory_space<vmem>>, vector<24x1xf32>
    %71 = vector.broadcast %70 : vector<24x1xf32> to vector<24x256xf32>
    %72 = arith.addf %69, %71 : vector<24x256xf32>
    %73 = vector.extract_strided_slice %72 {offsets = [0, 0], sizes = [8, 256], strides = [1, 1]} : vector<24x256xf32> to vector<8x256xf32>
    %c0_39 = arith.constant 0 : index
    %c0_40 = arith.constant 0 : index
    %c0_41 = arith.constant 0 : index
    %74 = vector.load %arg10[%c0_39, %c0_40, %c0_41] : memref<1x32x256xf32, #tpu.memory_space<vmem>>, vector<1x8x256xf32>
    %75 = vector.shape_cast %74 : vector<1x8x256xf32> to vector<8x256xf32>
    %76 = vector.shape_cast %73 : vector<8x256xf32> to vector<1x8x256xf32>
    tpu.vector_store %arg10[%c0_39, %c0_40, %c0_41], %76 {strides = array<i32>} : memref<1x32x256xf32, #tpu.memory_space<vmem>>, vector<1x8x256xf32>,
    %77 = vector.extract_strided_slice %72 {offsets = [8, 0], sizes = [8, 256], strides = [1, 1]} : vector<24x256xf32> to vector<8x256xf32>
    %cst_42 = arith.constant 0.000000e+00 : f32
    %78 = vector.broadcast %cst_42 : f32 to vector<8x256xf32>
    %79 = arith.maximumf %77, %78 : vector<8x256xf32>
    %80 = arith.truncf %79 : vector<8x256xf32> to vector<8x256xbf16>
    %c0_43 = arith.constant 0 : index
    %c128 = arith.constant 128 : index
    %81 = vector.load %arg11[%c0_43, %c128] : memref<8x512xbf16, #tpu.memory_space<vmem>>, vector<8x256xbf16>
    tpu.vector_store %arg11[%c0_43, %c128], %80 {strides = array<i32>} : memref<8x512xbf16, #tpu.memory_space<vmem>>, vector<8x256xbf16>,
    %82 = vector.extract_strided_slice %72 {offsets = [16, 0], sizes = [8, 256], strides = [1, 1]} : vector<24x256xf32> to vector<8x256xf32>
    %cst_44 = arith.constant 0.000000e+00 : f32
    %83 = vector.broadcast %cst_44 : f32 to vector<8x256xf32>
    %84 = arith.maximumf %82, %83 : vector<8x256xf32>
    %85 = arith.truncf %84 : vector<8x256xf32> to vector<8x256xbf16>
    %c0_45 = arith.constant 0 : index
    %c128_46 = arith.constant 128 : index
    %86 = vector.load %arg12[%c0_45, %c128_46] : memref<8x512xbf16, #tpu.memory_space<vmem>>, vector<8x256xbf16>
    tpu.vector_store %arg12[%c0_45, %c128_46], %85 {strides = array<i32>} : memref<8x512xbf16, #tpu.memory_space<vmem>>, vector<8x256xbf16>,
    %c0_47 = arith.constant 0 : index
    %c128_48 = arith.constant 128 : index
    %87 = vector.load %arg13[%c0_47, %c128_48] : memref<4x512xf32, #tpu.memory_space<vmem>>, vector<4x256xf32>
    tpu.vector_store %arg13[%c0_47, %c128_48], %1 {strides = array<i32>} : memref<4x512xf32, #tpu.memory_space<vmem>>, vector<4x256xf32>,
    %c0_49 = arith.constant 0 : index
    %c111 = arith.constant 111 : index
    %88 = vector.load %arg11[%c0_49, %c111] : memref<8x512xbf16, #tpu.memory_space<vmem>>, vector<8x256xbf16>
    %cst_50 = arith.constant 0.000000e+00 : f32
    %89 = arith.truncf %cst_50 : f32 to bf16
    %90 = vector.shape_cast %37 : vector<1x256xi1> to vector<1x256xi1>
    %91 = vector.broadcast %90 : vector<1x256xi1> to vector<8x256xi1>
    %92 = vector.broadcast %89 : bf16 to vector<8x256xbf16>
    %93 = arith.select %91, %88, %92 : vector<8x256xi1>, vector<8x256xbf16>
    %c0_51 = arith.constant 0 : index
    %c0_52 = arith.constant 0 : index
    %94 = vector.load %arg14[%c0_51, %c0_52] : memref<72x256xbf16, #tpu.memory_space<vmem>>, vector<8x256xbf16>
    tpu.vector_store %arg14[%c0_51, %c0_52], %93 {strides = array<i32>} : memref<72x256xbf16, #tpu.memory_space<vmem>>, vector<8x256xbf16>,
    %c0_53 = arith.constant 0 : index
    %c112 = arith.constant 112 : index
    %95 = vector.load %arg11[%c0_53, %c112] : memref<8x512xbf16, #tpu.memory_space<vmem>>, vector<8x256xbf16>
    %c8 = arith.constant 8 : index
    %c0_54 = arith.constant 0 : index
    %96 = vector.load %arg14[%c8, %c0_54] : memref<72x256xbf16, #tpu.memory_space<vmem>>, vector<8x256xbf16>
    tpu.vector_store %arg14[%c8, %c0_54], %95 {strides = array<i32>} : memref<72x256xbf16, #tpu.memory_space<vmem>>, vector<8x256xbf16>,
    %c0_55 = arith.constant 0 : index
    %c113 = arith.constant 113 : index
    %97 = vector.load %arg11[%c0_55, %c113] : memref<8x512xbf16, #tpu.memory_space<vmem>>, vector<8x256xbf16>
    %cst_56 = arith.constant 0.000000e+00 : f32
    %98 = arith.truncf %cst_56 : f32 to bf16
    %99 = vector.shape_cast %46 : vector<1x256xi1> to vector<1x256xi1>
    %100 = vector.broadcast %99 : vector<1x256xi1> to vector<8x256xi1>
    %101 = vector.broadcast %98 : bf16 to vector<8x256xbf16>
    %102 = arith.select %100, %97, %101 : vector<8x256xi1>, vector<8x256xbf16>
    %c16 = arith.constant 16 : index
    %c0_57 = arith.constant 0 : index
    %103 = vector.load %arg14[%c16, %c0_57] : memref<72x256xbf16, #tpu.memory_space<vmem>>, vector<8x256xbf16>
    tpu.vector_store %arg14[%c16, %c0_57], %102 {strides = array<i32>} : memref<72x256xbf16, #tpu.memory_space<vmem>>, vector<8x256xbf16>,
    %c0_58 = arith.constant 0 : index
    %c127 = arith.constant 127 : index
    %104 = vector.load %arg11[%c0_58, %c127] : memref<8x512xbf16, #tpu.memory_space<vmem>>, vector<8x256xbf16>
    %cst_59 = arith.constant 0.000000e+00 : f32
    %105 = arith.truncf %cst_59 : f32 to bf16
    %106 = vector.shape_cast %37 : vector<1x256xi1> to vector<1x256xi1>
    %107 = vector.broadcast %106 : vector<1x256xi1> to vector<8x256xi1>
    %108 = vector.broadcast %105 : bf16 to vector<8x256xbf16>
    %109 = arith.select %107, %104, %108 : vector<8x256xi1>, vector<8x256xbf16>
    %c24 = arith.constant 24 : index
    %c0_60 = arith.constant 0 : index
    %110 = vector.load %arg14[%c24, %c0_60] : memref<72x256xbf16, #tpu.memory_space<vmem>>, vector<8x256xbf16>
    tpu.vector_store %arg14[%c24, %c0_60], %109 {strides = array<i32>} : memref<72x256xbf16, #tpu.memory_space<vmem>>, vector<8x256xbf16>,
    %c0_61 = arith.constant 0 : index
    %c128_62 = arith.constant 128 : index
    %111 = vector.load %arg11[%c0_61, %c128_62] : memref<8x512xbf16, #tpu.memory_space<vmem>>, vector<8x256xbf16>
    %c32 = arith.constant 32 : index
    %c0_63 = arith.constant 0 : index
    %112 = vector.load %arg14[%c32, %c0_63] : memref<72x256xbf16, #tpu.memory_space<vmem>>, vector<8x256xbf16>
    tpu.vector_store %arg14[%c32, %c0_63], %111 {strides = array<i32>} : memref<72x256xbf16, #tpu.memory_space<vmem>>, vector<8x256xbf16>,
    %c0_64 = arith.constant 0 : index
    %c129 = arith.constant 129 : index
    %113 = vector.load %arg11[%c0_64, %c129] : memref<8x512xbf16, #tpu.memory_space<vmem>>, vector<8x256xbf16>
    %cst_65 = arith.constant 0.000000e+00 : f32
    %114 = arith.truncf %cst_65 : f32 to bf16
    %115 = vector.shape_cast %46 : vector<1x256xi1> to vector<1x256xi1>
    %116 = vector.broadcast %115 : vector<1x256xi1> to vector<8x256xi1>
    %117 = vector.broadcast %114 : bf16 to vector<8x256xbf16>
    %118 = arith.select %116, %113, %117 : vector<8x256xi1>, vector<8x256xbf16>
    %c40 = arith.constant 40 : index
    %c0_66 = arith.constant 0 : index
    %119 = vector.load %arg14[%c40, %c0_66] : memref<72x256xbf16, #tpu.memory_space<vmem>>, vector<8x256xbf16>
    tpu.vector_store %arg14[%c40, %c0_66], %118 {strides = array<i32>} : memref<72x256xbf16, #tpu.memory_space<vmem>>, vector<8x256xbf16>,
    %c0_67 = arith.constant 0 : index
    %c143 = arith.constant 143 : index
    %120 = vector.load %arg11[%c0_67, %c143] : memref<8x512xbf16, #tpu.memory_space<vmem>>, vector<8x256xbf16>
    %cst_68 = arith.constant 0.000000e+00 : f32
    %121 = arith.truncf %cst_68 : f32 to bf16
    %122 = vector.shape_cast %37 : vector<1x256xi1> to vector<1x256xi1>
    %123 = vector.broadcast %122 : vector<1x256xi1> to vector<8x256xi1>
    %124 = vector.broadcast %121 : bf16 to vector<8x256xbf16>
    %125 = arith.select %123, %120, %124 : vector<8x256xi1>, vector<8x256xbf16>
    %c48 = arith.constant 48 : index
    %c0_69 = arith.constant 0 : index
    %126 = vector.load %arg14[%c48, %c0_69] : memref<72x256xbf16, #tpu.memory_space<vmem>>, vector<8x256xbf16>
    tpu.vector_store %arg14[%c48, %c0_69], %125 {strides = array<i32>} : memref<72x256xbf16, #tpu.memory_space<vmem>>, vector<8x256xbf16>,
    %c0_70 = arith.constant 0 : index
    %c144 = arith.constant 144 : index
    %127 = vector.load %arg11[%c0_70, %c144] : memref<8x512xbf16, #tpu.memory_space<vmem>>, vector<8x256xbf16>
    %c56 = arith.constant 56 : index
    %c0_71 = arith.constant 0 : index
    %128 = vector.load %arg14[%c56, %c0_71] : memref<72x256xbf16, #tpu.memory_space<vmem>>, vector<8x256xbf16>
    tpu.vector_store %arg14[%c56, %c0_71], %127 {strides = array<i32>} : memref<72x256xbf16, #tpu.memory_space<vmem>>, vector<8x256xbf16>,
    %c0_72 = arith.constant 0 : index
    %c145 = arith.constant 145 : index
    %129 = vector.load %arg11[%c0_72, %c145] : memref<8x512xbf16, #tpu.memory_space<vmem>>, vector<8x256xbf16>
    %cst_73 = arith.constant 0.000000e+00 : f32
    %130 = arith.truncf %cst_73 : f32 to bf16
    %131 = vector.shape_cast %46 : vector<1x256xi1> to vector<1x256xi1>
    %132 = vector.broadcast %131 : vector<1x256xi1> to vector<8x256xi1>
    %133 = vector.broadcast %130 : bf16 to vector<8x256xbf16>
    %134 = arith.select %132, %129, %133 : vector<8x256xi1>, vector<8x256xbf16>
    %c64 = arith.constant 64 : index
    %c0_74 = arith.constant 0 : index
    %135 = vector.load %arg14[%c64, %c0_74] : memref<72x256xbf16, #tpu.memory_space<vmem>>, vector<8x256xbf16>
    tpu.vector_store %arg14[%c64, %c0_74], %134 {strides = array<i32>} : memref<72x256xbf16, #tpu.memory_space<vmem>>, vector<8x256xbf16>,
    %c0_75 = arith.constant 0 : index
    %c0_76 = arith.constant 0 : index
    %136 = vector.load %arg4[%c0_75, %c0_76] : memref<8x72xbf16, #tpu.memory_space<vmem>>, vector<8x72xbf16>
    %c0_77 = arith.constant 0 : index
    %c0_78 = arith.constant 0 : index
    %137 = vector.load %arg14[%c0_77, %c0_78] : memref<72x256xbf16, #tpu.memory_space<vmem>>, vector<72x256xbf16>
    %cst_79 = arith.constant dense<0.000000e+00> : vector<8x256xf32>
    %138 = tpu.matmul %136, %137, %cst_79 {dimension_numbers = #tpu.dot_dimension_numbers<[1], [0], [0], [1], [0, 0, 1, 1], [], []>} : vector<8x72xbf16>, vector<72x256xbf16>, vector<8x256xf32> -> vector<8x256xf32>
    %c0_80 = arith.constant 0 : index
    %c0_81 = arith.constant 0 : index
    %139 = vector.load %arg5[%c0_80, %c0_81] : memref<8x1xf32, #tpu.memory_space<vmem>>, vector<8x1xf32>
    %140 = vector.broadcast %139 : vector<8x1xf32> to vector<8x256xf32>
    %141 = arith.addf %138, %140 : vector<8x256xf32>
    %cst_82 = arith.constant 0.000000e+00 : f32
    %142 = vector.broadcast %cst_82 : f32 to vector<8x256xf32>
    %143 = arith.maximumf %141, %142 : vector<8x256xf32>
    %c0_83 = arith.constant 0 : index
    %c8_84 = arith.constant 8 : index
    %c0_85 = arith.constant 0 : index
    %144 = vector.load %arg10[%c0_83, %c8_84, %c0_85] : memref<1x32x256xf32, #tpu.memory_space<vmem>>, vector<1x8x256xf32>
    %145 = vector.shape_cast %144 : vector<1x8x256xf32> to vector<8x256xf32>
    %146 = vector.shape_cast %143 : vector<8x256xf32> to vector<1x8x256xf32>
    tpu.vector_store %arg10[%c0_83, %c8_84, %c0_85], %146 {strides = array<i32>} : memref<1x32x256xf32, #tpu.memory_space<vmem>>, vector<1x8x256xf32>,
    %c0_86 = arith.constant 0 : index
    %c94 = arith.constant 94 : index
    %147 = vector.load %arg12[%c0_86, %c94] : memref<8x512xbf16, #tpu.memory_space<vmem>>, vector<8x256xbf16>
    %cst_87 = arith.constant 0.000000e+00 : f32
    %148 = arith.truncf %cst_87 : f32 to bf16
    %149 = vector.shape_cast %28 : vector<1x256xi1> to vector<1x256xi1>
    %150 = vector.broadcast %149 : vector<1x256xi1> to vector<8x256xi1>
    %151 = vector.broadcast %148 : bf16 to vector<8x256xbf16>
    %152 = arith.select %150, %147, %151 : vector<8x256xi1>, vector<8x256xbf16>
    %c0_88 = arith.constant 0 : index
    %c0_89 = arith.constant 0 : index
    %153 = vector.load %arg15[%c0_88, %c0_89] : memref<200x256xbf16, #tpu.memory_space<vmem>>, vector<8x256xbf16>
    tpu.vector_store %arg15[%c0_88, %c0_89], %152 {strides = array<i32>} : memref<200x256xbf16, #tpu.memory_space<vmem>>, vector<8x256xbf16>,
    %c0_90 = arith.constant 0 : index
    %c95 = arith.constant 95 : index
    %154 = vector.load %arg12[%c0_90, %c95] : memref<8x512xbf16, #tpu.memory_space<vmem>>, vector<8x256xbf16>
    %cst_91 = arith.constant 0.000000e+00 : f32
    %155 = arith.truncf %cst_91 : f32 to bf16
    %156 = vector.shape_cast %37 : vector<1x256xi1> to vector<1x256xi1>
    %157 = vector.broadcast %156 : vector<1x256xi1> to vector<8x256xi1>
    %158 = vector.broadcast %155 : bf16 to vector<8x256xbf16>
    %159 = arith.select %157, %154, %158 : vector<8x256xi1>, vector<8x256xbf16>
    %c8_92 = arith.constant 8 : index
    %c0_93 = arith.constant 0 : index
    %160 = vector.load %arg15[%c8_92, %c0_93] : memref<200x256xbf16, #tpu.memory_space<vmem>>, vector<8x256xbf16>
    tpu.vector_store %arg15[%c8_92, %c0_93], %159 {strides = array<i32>} : memref<200x256xbf16, #tpu.memory_space<vmem>>, vector<8x256xbf16>,
    %c0_94 = arith.constant 0 : index
    %c96 = arith.constant 96 : index
    %161 = vector.load %arg12[%c0_94, %c96] : memref<8x512xbf16, #tpu.memory_space<vmem>>, vector<8x256xbf16>
    %c16_95 = arith.constant 16 : index
    %c0_96 = arith.constant 0 : index
    %162 = vector.load %arg15[%c16_95, %c0_96] : memref<200x256xbf16, #tpu.memory_space<vmem>>, vector<8x256xbf16>
    tpu.vector_store %arg15[%c16_95, %c0_96], %161 {strides = array<i32>} : memref<200x256xbf16, #tpu.memory_space<vmem>>, vector<8x256xbf16>,
    %c0_97 = arith.constant 0 : index
    %c97 = arith.constant 97 : index
    %163 = vector.load %arg12[%c0_97, %c97] : memref<8x512xbf16, #tpu.memory_space<vmem>>, vector<8x256xbf16>
    %cst_98 = arith.constant 0.000000e+00 : f32
    %164 = arith.truncf %cst_98 : f32 to bf16
    %165 = vector.shape_cast %46 : vector<1x256xi1> to vector<1x256xi1>
    %166 = vector.broadcast %165 : vector<1x256xi1> to vector<8x256xi1>
    %167 = vector.broadcast %164 : bf16 to vector<8x256xbf16>
    %168 = arith.select %166, %163, %167 : vector<8x256xi1>, vector<8x256xbf16>
    %c24_99 = arith.constant 24 : index
    %c0_100 = arith.constant 0 : index
    %169 = vector.load %arg15[%c24_99, %c0_100] : memref<200x256xbf16, #tpu.memory_space<vmem>>, vector<8x256xbf16>
    tpu.vector_store %arg15[%c24_99, %c0_100], %168 {strides = array<i32>} : memref<200x256xbf16, #tpu.memory_space<vmem>>, vector<8x256xbf16>,
    %c0_101 = arith.constant 0 : index
    %c98 = arith.constant 98 : index
    %170 = vector.load %arg12[%c0_101, %c98] : memref<8x512xbf16, #tpu.memory_space<vmem>>, vector<8x256xbf16>
    %cst_102 = arith.constant 0.000000e+00 : f32
    %171 = arith.truncf %cst_102 : f32 to bf16
    %172 = vector.shape_cast %55 : vector<1x256xi1> to vector<1x256xi1>
    %173 = vector.broadcast %172 : vector<1x256xi1> to vector<8x256xi1>
    %174 = vector.broadcast %171 : bf16 to vector<8x256xbf16>
    %175 = arith.select %173, %170, %174 : vector<8x256xi1>, vector<8x256xbf16>
    %c32_103 = arith.constant 32 : index
    %c0_104 = arith.constant 0 : index
    %176 = vector.load %arg15[%c32_103, %c0_104] : memref<200x256xbf16, #tpu.memory_space<vmem>>, vector<8x256xbf16>
    tpu.vector_store %arg15[%c32_103, %c0_104], %175 {strides = array<i32>} : memref<200x256xbf16, #tpu.memory_space<vmem>>, vector<8x256xbf16>,
    %c0_105 = arith.constant 0 : index
    %c110 = arith.constant 110 : index
    %177 = vector.load %arg12[%c0_105, %c110] : memref<8x512xbf16, #tpu.memory_space<vmem>>, vector<8x256xbf16>
    %cst_106 = arith.constant 0.000000e+00 : f32
    %178 = arith.truncf %cst_106 : f32 to bf16
    %179 = vector.shape_cast %28 : vector<1x256xi1> to vector<1x256xi1>
    %180 = vector.broadcast %179 : vector<1x256xi1> to vector<8x256xi1>
    %181 = vector.broadcast %178 : bf16 to vector<8x256xbf16>
    %182 = arith.select %180, %177, %181 : vector<8x256xi1>, vector<8x256xbf16>
    %c40_107 = arith.constant 40 : index
    %c0_108 = arith.constant 0 : index
    %183 = vector.load %arg15[%c40_107, %c0_108] : memref<200x256xbf16, #tpu.memory_space<vmem>>, vector<8x256xbf16>
    tpu.vector_store %arg15[%c40_107, %c0_108], %182 {strides = array<i32>} : memref<200x256xbf16, #tpu.memory_space<vmem>>, vector<8x256xbf16>,
    %c0_109 = arith.constant 0 : index
    %c111_110 = arith.constant 111 : index
    %184 = vector.load %arg12[%c0_109, %c111_110] : memref<8x512xbf16, #tpu.memory_space<vmem>>, vector<8x256xbf16>
    %cst_111 = arith.constant 0.000000e+00 : f32
    %185 = arith.truncf %cst_111 : f32 to bf16
    %186 = vector.shape_cast %37 : vector<1x256xi1> to vector<1x256xi1>
    %187 = vector.broadcast %186 : vector<1x256xi1> to vector<8x256xi1>
    %188 = vector.broadcast %185 : bf16 to vector<8x256xbf16>
    %189 = arith.select %187, %184, %188 : vector<8x256xi1>, vector<8x256xbf16>
    %c48_112 = arith.constant 48 : index
    %c0_113 = arith.constant 0 : index
    %190 = vector.load %arg15[%c48_112, %c0_113] : memref<200x256xbf16, #tpu.memory_space<vmem>>, vector<8x256xbf16>
    tpu.vector_store %arg15[%c48_112, %c0_113], %189 {strides = array<i32>} : memref<200x256xbf16, #tpu.memory_space<vmem>>, vector<8x256xbf16>,
    %c0_114 = arith.constant 0 : index
    %c112_115 = arith.constant 112 : index
    %191 = vector.load %arg12[%c0_114, %c112_115] : memref<8x512xbf16, #tpu.memory_space<vmem>>, vector<8x256xbf16>
    %c56_116 = arith.constant 56 : index
    %c0_117 = arith.constant 0 : index
    %192 = vector.load %arg15[%c56_116, %c0_117] : memref<200x256xbf16, #tpu.memory_space<vmem>>, vector<8x256xbf16>
    tpu.vector_store %arg15[%c56_116, %c0_117], %191 {strides = array<i32>} : memref<200x256xbf16, #tpu.memory_space<vmem>>, vector<8x256xbf16>,
    %c0_118 = arith.constant 0 : index
    %c113_119 = arith.constant 113 : index
    %193 = vector.load %arg12[%c0_118, %c113_119] : memref<8x512xbf16, #tpu.memory_space<vmem>>, vector<8x256xbf16>
    %cst_120 = arith.constant 0.000000e+00 : f32
    %194 = arith.truncf %cst_120 : f32 to bf16
    %195 = vector.shape_cast %46 : vector<1x256xi1> to vector<1x256xi1>
    %196 = vector.broadcast %195 : vector<1x256xi1> to vector<8x256xi1>
    %197 = vector.broadcast %194 : bf16 to vector<8x256xbf16>
    %198 = arith.select %196, %193, %197 : vector<8x256xi1>, vector<8x256xbf16>
    %c64_121 = arith.constant 64 : index
    %c0_122 = arith.constant 0 : index
    %199 = vector.load %arg15[%c64_121, %c0_122] : memref<200x256xbf16, #tpu.memory_space<vmem>>, vector<8x256xbf16>
    tpu.vector_store %arg15[%c64_121, %c0_122], %198 {strides = array<i32>} : memref<200x256xbf16, #tpu.memory_space<vmem>>, vector<8x256xbf16>,
    %c0_123 = arith.constant 0 : index
    %c114 = arith.constant 114 : index
    %200 = vector.load %arg12[%c0_123, %c114] : memref<8x512xbf16, #tpu.memory_space<vmem>>, vector<8x256xbf16>
    %cst_124 = arith.constant 0.000000e+00 : f32
    %201 = arith.truncf %cst_124 : f32 to bf16
    %202 = vector.shape_cast %55 : vector<1x256xi1> to vector<1x256xi1>
    %203 = vector.broadcast %202 : vector<1x256xi1> to vector<8x256xi1>
    %204 = vector.broadcast %201 : bf16 to vector<8x256xbf16>
    %205 = arith.select %203, %200, %204 : vector<8x256xi1>, vector<8x256xbf16>
    %c72 = arith.constant 72 : index
    %c0_125 = arith.constant 0 : index
    %206 = vector.load %arg15[%c72, %c0_125] : memref<200x256xbf16, #tpu.memory_space<vmem>>, vector<8x256xbf16>
    tpu.vector_store %arg15[%c72, %c0_125], %205 {strides = array<i32>} : memref<200x256xbf16, #tpu.memory_space<vmem>>, vector<8x256xbf16>,
    %c0_126 = arith.constant 0 : index
    %c126 = arith.constant 126 : index
    %207 = vector.load %arg12[%c0_126, %c126] : memref<8x512xbf16, #tpu.memory_space<vmem>>, vector<8x256xbf16>
    %cst_127 = arith.constant 0.000000e+00 : f32
    %208 = arith.truncf %cst_127 : f32 to bf16
    %209 = vector.shape_cast %28 : vector<1x256xi1> to vector<1x256xi1>
    %210 = vector.broadcast %209 : vector<1x256xi1> to vector<8x256xi1>
    %211 = vector.broadcast %208 : bf16 to vector<8x256xbf16>
    %212 = arith.select %210, %207, %211 : vector<8x256xi1>, vector<8x256xbf16>
    %c80 = arith.constant 80 : index
    %c0_128 = arith.constant 0 : index
    %213 = vector.load %arg15[%c80, %c0_128] : memref<200x256xbf16, #tpu.memory_space<vmem>>, vector<8x256xbf16>
    tpu.vector_store %arg15[%c80, %c0_128], %212 {strides = array<i32>} : memref<200x256xbf16, #tpu.memory_space<vmem>>, vector<8x256xbf16>,
    %c0_129 = arith.constant 0 : index
    %c127_130 = arith.constant 127 : index
    %214 = vector.load %arg12[%c0_129, %c127_130] : memref<8x512xbf16, #tpu.memory_space<vmem>>, vector<8x256xbf16>
    %cst_131 = arith.constant 0.000000e+00 : f32
    %215 = arith.truncf %cst_131 : f32 to bf16
    %216 = vector.shape_cast %37 : vector<1x256xi1> to vector<1x256xi1>
    %217 = vector.broadcast %216 : vector<1x256xi1> to vector<8x256xi1>
    %218 = vector.broadcast %215 : bf16 to vector<8x256xbf16>
    %219 = arith.select %217, %214, %218 : vector<8x256xi1>, vector<8x256xbf16>
    %c88 = arith.constant 88 : index
    %c0_132 = arith.constant 0 : index
    %220 = vector.load %arg15[%c88, %c0_132] : memref<200x256xbf16, #tpu.memory_space<vmem>>, vector<8x256xbf16>
    tpu.vector_store %arg15[%c88, %c0_132], %219 {strides = array<i32>} : memref<200x256xbf16, #tpu.memory_space<vmem>>, vector<8x256xbf16>,
    %c0_133 = arith.constant 0 : index
    %c128_134 = arith.constant 128 : index
    %221 = vector.load %arg12[%c0_133, %c128_134] : memref<8x512xbf16, #tpu.memory_space<vmem>>, vector<8x256xbf16>
    %c96_135 = arith.constant 96 : index
    %c0_136 = arith.constant 0 : index
    %222 = vector.load %arg15[%c96_135, %c0_136] : memref<200x256xbf16, #tpu.memory_space<vmem>>, vector<8x256xbf16>
    tpu.vector_store %arg15[%c96_135, %c0_136], %221 {strides = array<i32>} : memref<200x256xbf16, #tpu.memory_space<vmem>>, vector<8x256xbf16>,
    %c0_137 = arith.constant 0 : index
    %c129_138 = arith.constant 129 : index
    %223 = vector.load %arg12[%c0_137, %c129_138] : memref<8x512xbf16, #tpu.memory_space<vmem>>, vector<8x256xbf16>
    %cst_139 = arith.constant 0.000000e+00 : f32
    %224 = arith.truncf %cst_139 : f32 to bf16
    %225 = vector.shape_cast %46 : vector<1x256xi1> to vector<1x256xi1>
    %226 = vector.broadcast %225 : vector<1x256xi1> to vector<8x256xi1>
    %227 = vector.broadcast %224 : bf16 to vector<8x256xbf16>
    %228 = arith.select %226, %223, %227 : vector<8x256xi1>, vector<8x256xbf16>
    %c104 = arith.constant 104 : index
    %c0_140 = arith.constant 0 : index
    %229 = vector.load %arg15[%c104, %c0_140] : memref<200x256xbf16, #tpu.memory_space<vmem>>, vector<8x256xbf16>
    tpu.vector_store %arg15[%c104, %c0_140], %228 {strides = array<i32>} : memref<200x256xbf16, #tpu.memory_space<vmem>>, vector<8x256xbf16>,
    %c0_141 = arith.constant 0 : index
    %c130 = arith.constant 130 : index
    %230 = vector.load %arg12[%c0_141, %c130] : memref<8x512xbf16, #tpu.memory_space<vmem>>, vector<8x256xbf16>
    %cst_142 = arith.constant 0.000000e+00 : f32
    %231 = arith.truncf %cst_142 : f32 to bf16
    %232 = vector.shape_cast %55 : vector<1x256xi1> to vector<1x256xi1>
    %233 = vector.broadcast %232 : vector<1x256xi1> to vector<8x256xi1>
    %234 = vector.broadcast %231 : bf16 to vector<8x256xbf16>
    %235 = arith.select %233, %230, %234 : vector<8x256xi1>, vector<8x256xbf16>
    %c112_143 = arith.constant 112 : index
    %c0_144 = arith.constant 0 : index
    %236 = vector.load %arg15[%c112_143, %c0_144] : memref<200x256xbf16, #tpu.memory_space<vmem>>, vector<8x256xbf16>
    tpu.vector_store %arg15[%c112_143, %c0_144], %235 {strides = array<i32>} : memref<200x256xbf16, #tpu.memory_space<vmem>>, vector<8x256xbf16>,
    %c0_145 = arith.constant 0 : index
    %c142 = arith.constant 142 : index
    %237 = vector.load %arg12[%c0_145, %c142] : memref<8x512xbf16, #tpu.memory_space<vmem>>, vector<8x256xbf16>
    %cst_146 = arith.constant 0.000000e+00 : f32
    %238 = arith.truncf %cst_146 : f32 to bf16
    %239 = vector.shape_cast %28 : vector<1x256xi1> to vector<1x256xi1>
    %240 = vector.broadcast %239 : vector<1x256xi1> to vector<8x256xi1>
    %241 = vector.broadcast %238 : bf16 to vector<8x256xbf16>
    %242 = arith.select %240, %237, %241 : vector<8x256xi1>, vector<8x256xbf16>
    %c120 = arith.constant 120 : index
    %c0_147 = arith.constant 0 : index
    %243 = vector.load %arg15[%c120, %c0_147] : memref<200x256xbf16, #tpu.memory_space<vmem>>, vector<8x256xbf16>
    tpu.vector_store %arg15[%c120, %c0_147], %242 {strides = array<i32>} : memref<200x256xbf16, #tpu.memory_space<vmem>>, vector<8x256xbf16>,
    %c0_148 = arith.constant 0 : index
    %c143_149 = arith.constant 143 : index
    %244 = vector.load %arg12[%c0_148, %c143_149] : memref<8x512xbf16, #tpu.memory_space<vmem>>, vector<8x256xbf16>
    %cst_150 = arith.constant 0.000000e+00 : f32
    %245 = arith.truncf %cst_150 : f32 to bf16
    %246 = vector.shape_cast %37 : vector<1x256xi1> to vector<1x256xi1>
    %247 = vector.broadcast %246 : vector<1x256xi1> to vector<8x256xi1>
    %248 = vector.broadcast %245 : bf16 to vector<8x256xbf16>
    %249 = arith.select %247, %244, %248 : vector<8x256xi1>, vector<8x256xbf16>
    %c128_151 = arith.constant 128 : index
    %c0_152 = arith.constant 0 : index
    %250 = vector.load %arg15[%c128_151, %c0_152] : memref<200x256xbf16, #tpu.memory_space<vmem>>, vector<8x256xbf16>
    tpu.vector_store %arg15[%c128_151, %c0_152], %249 {strides = array<i32>} : memref<200x256xbf16, #tpu.memory_space<vmem>>, vector<8x256xbf16>,
    %c0_153 = arith.constant 0 : index
    %c144_154 = arith.constant 144 : index
    %251 = vector.load %arg12[%c0_153, %c144_154] : memref<8x512xbf16, #tpu.memory_space<vmem>>, vector<8x256xbf16>
    %c136 = arith.constant 136 : index
    %c0_155 = arith.constant 0 : index
    %252 = vector.load %arg15[%c136, %c0_155] : memref<200x256xbf16, #tpu.memory_space<vmem>>, vector<8x256xbf16>
    tpu.vector_store %arg15[%c136, %c0_155], %251 {strides = array<i32>} : memref<200x256xbf16, #tpu.memory_space<vmem>>, vector<8x256xbf16>,
    %c0_156 = arith.constant 0 : index
    %c145_157 = arith.constant 145 : index
    %253 = vector.load %arg12[%c0_156, %c145_157] : memref<8x512xbf16, #tpu.memory_space<vmem>>, vector<8x256xbf16>
    %cst_158 = arith.constant 0.000000e+00 : f32
    %254 = arith.truncf %cst_158 : f32 to bf16
    %255 = vector.shape_cast %46 : vector<1x256xi1> to vector<1x256xi1>
    %256 = vector.broadcast %255 : vector<1x256xi1> to vector<8x256xi1>
    %257 = vector.broadcast %254 : bf16 to vector<8x256xbf16>
    %258 = arith.select %256, %253, %257 : vector<8x256xi1>, vector<8x256xbf16>
    %c144_159 = arith.constant 144 : index
    %c0_160 = arith.constant 0 : index
    %259 = vector.load %arg15[%c144_159, %c0_160] : memref<200x256xbf16, #tpu.memory_space<vmem>>, vector<8x256xbf16>
    tpu.vector_store %arg15[%c144_159, %c0_160], %258 {strides = array<i32>} : memref<200x256xbf16, #tpu.memory_space<vmem>>, vector<8x256xbf16>,
    %c0_161 = arith.constant 0 : index
    %c146 = arith.constant 146 : index
    %260 = vector.load %arg12[%c0_161, %c146] : memref<8x512xbf16, #tpu.memory_space<vmem>>, vector<8x256xbf16>
    %cst_162 = arith.constant 0.000000e+00 : f32
    %261 = arith.truncf %cst_162 : f32 to bf16
    %262 = vector.shape_cast %55 : vector<1x256xi1> to vector<1x256xi1>
    %263 = vector.broadcast %262 : vector<1x256xi1> to vector<8x256xi1>
    %264 = vector.broadcast %261 : bf16 to vector<8x256xbf16>
    %265 = arith.select %263, %260, %264 : vector<8x256xi1>, vector<8x256xbf16>
    %c152 = arith.constant 152 : index
    %c0_163 = arith.constant 0 : index
    %266 = vector.load %arg15[%c152, %c0_163] : memref<200x256xbf16, #tpu.memory_space<vmem>>, vector<8x256xbf16>
    tpu.vector_store %arg15[%c152, %c0_163], %265 {strides = array<i32>} : memref<200x256xbf16, #tpu.memory_space<vmem>>, vector<8x256xbf16>,
    %c0_164 = arith.constant 0 : index
    %c158 = arith.constant 158 : index
    %267 = vector.load %arg12[%c0_164, %c158] : memref<8x512xbf16, #tpu.memory_space<vmem>>, vector<8x256xbf16>
    %cst_165 = arith.constant 0.000000e+00 : f32
    %268 = arith.truncf %cst_165 : f32 to bf16
    %269 = vector.shape_cast %28 : vector<1x256xi1> to vector<1x256xi1>
    %270 = vector.broadcast %269 : vector<1x256xi1> to vector<8x256xi1>
    %271 = vector.broadcast %268 : bf16 to vector<8x256xbf16>
    %272 = arith.select %270, %267, %271 : vector<8x256xi1>, vector<8x256xbf16>
    %c160 = arith.constant 160 : index
    %c0_166 = arith.constant 0 : index
    %273 = vector.load %arg15[%c160, %c0_166] : memref<200x256xbf16, #tpu.memory_space<vmem>>, vector<8x256xbf16>
    tpu.vector_store %arg15[%c160, %c0_166], %272 {strides = array<i32>} : memref<200x256xbf16, #tpu.memory_space<vmem>>, vector<8x256xbf16>,
    %c0_167 = arith.constant 0 : index
    %c159 = arith.constant 159 : index
    %274 = vector.load %arg12[%c0_167, %c159] : memref<8x512xbf16, #tpu.memory_space<vmem>>, vector<8x256xbf16>
    %cst_168 = arith.constant 0.000000e+00 : f32
    %275 = arith.truncf %cst_168 : f32 to bf16
    %276 = vector.shape_cast %37 : vector<1x256xi1> to vector<1x256xi1>
    %277 = vector.broadcast %276 : vector<1x256xi1> to vector<8x256xi1>
    %278 = vector.broadcast %275 : bf16 to vector<8x256xbf16>
    %279 = arith.select %277, %274, %278 : vector<8x256xi1>, vector<8x256xbf16>
    %c168 = arith.constant 168 : index
    %c0_169 = arith.constant 0 : index
    %280 = vector.load %arg15[%c168, %c0_169] : memref<200x256xbf16, #tpu.memory_space<vmem>>, vector<8x256xbf16>
    tpu.vector_store %arg15[%c168, %c0_169], %279 {strides = array<i32>} : memref<200x256xbf16, #tpu.memory_space<vmem>>, vector<8x256xbf16>,
    %c0_170 = arith.constant 0 : index
    %c160_171 = arith.constant 160 : index
    %281 = vector.load %arg12[%c0_170, %c160_171] : memref<8x512xbf16, #tpu.memory_space<vmem>>, vector<8x256xbf16>
    %c176 = arith.constant 176 : index
    %c0_172 = arith.constant 0 : index
    %282 = vector.load %arg15[%c176, %c0_172] : memref<200x256xbf16, #tpu.memory_space<vmem>>, vector<8x256xbf16>
    tpu.vector_store %arg15[%c176, %c0_172], %281 {strides = array<i32>} : memref<200x256xbf16, #tpu.memory_space<vmem>>, vector<8x256xbf16>,
    %c0_173 = arith.constant 0 : index
    %c161 = arith.constant 161 : index
    %283 = vector.load %arg12[%c0_173, %c161] : memref<8x512xbf16, #tpu.memory_space<vmem>>, vector<8x256xbf16>
    %cst_174 = arith.constant 0.000000e+00 : f32
    %284 = arith.truncf %cst_174 : f32 to bf16
    %285 = vector.shape_cast %46 : vector<1x256xi1> to vector<1x256xi1>
    %286 = vector.broadcast %285 : vector<1x256xi1> to vector<8x256xi1>
    %287 = vector.broadcast %284 : bf16 to vector<8x256xbf16>
    %288 = arith.select %286, %283, %287 : vector<8x256xi1>, vector<8x256xbf16>
    %c184 = arith.constant 184 : index
    %c0_175 = arith.constant 0 : index
    %289 = vector.load %arg15[%c184, %c0_175] : memref<200x256xbf16, #tpu.memory_space<vmem>>, vector<8x256xbf16>
    tpu.vector_store %arg15[%c184, %c0_175], %288 {strides = array<i32>} : memref<200x256xbf16, #tpu.memory_space<vmem>>, vector<8x256xbf16>,
    %c0_176 = arith.constant 0 : index
    %c162 = arith.constant 162 : index
    %290 = vector.load %arg12[%c0_176, %c162] : memref<8x512xbf16, #tpu.memory_space<vmem>>, vector<8x256xbf16>
    %cst_177 = arith.constant 0.000000e+00 : f32
    %291 = arith.truncf %cst_177 : f32 to bf16
    %292 = vector.shape_cast %55 : vector<1x256xi1> to vector<1x256xi1>
    %293 = vector.broadcast %292 : vector<1x256xi1> to vector<8x256xi1>
    %294 = vector.broadcast %291 : bf16 to vector<8x256xbf16>
    %295 = arith.select %293, %290, %294 : vector<8x256xi1>, vector<8x256xbf16>
    %c192 = arith.constant 192 : index
    %c0_178 = arith.constant 0 : index
    %296 = vector.load %arg15[%c192, %c0_178] : memref<200x256xbf16, #tpu.memory_space<vmem>>, vector<8x256xbf16>
    tpu.vector_store %arg15[%c192, %c0_178], %295 {strides = array<i32>} : memref<200x256xbf16, #tpu.memory_space<vmem>>, vector<8x256xbf16>,
    %c0_179 = arith.constant 0 : index
    %c0_180 = arith.constant 0 : index
    %297 = vector.load %arg6[%c0_179, %c0_180] : memref<8x200xbf16, #tpu.memory_space<vmem>>, vector<8x200xbf16>
    %c0_181 = arith.constant 0 : index
    %c0_182 = arith.constant 0 : index
    %298 = vector.load %arg15[%c0_181, %c0_182] : memref<200x256xbf16, #tpu.memory_space<vmem>>, vector<200x256xbf16>
    %cst_183 = arith.constant dense<0.000000e+00> : vector<8x256xf32>
    %299 = tpu.matmul %297, %298, %cst_183 {dimension_numbers = #tpu.dot_dimension_numbers<[1], [0], [0], [1], [0, 0, 1, 1], [], []>} : vector<8x200xbf16>, vector<200x256xbf16>, vector<8x256xf32> -> vector<8x256xf32>
    %c0_184 = arith.constant 0 : index
    %c0_185 = arith.constant 0 : index
    %300 = vector.load %arg7[%c0_184, %c0_185] : memref<8x1xf32, #tpu.memory_space<vmem>>, vector<8x1xf32>
    %301 = vector.broadcast %300 : vector<8x1xf32> to vector<8x256xf32>
    %302 = arith.addf %299, %301 : vector<8x256xf32>
    %cst_186 = arith.constant 0.000000e+00 : f32
    %303 = vector.broadcast %cst_186 : f32 to vector<8x256xf32>
    %304 = arith.maximumf %302, %303 : vector<8x256xf32>
    %c0_187 = arith.constant 0 : index
    %c16_188 = arith.constant 16 : index
    %c0_189 = arith.constant 0 : index
    %305 = vector.load %arg10[%c0_187, %c16_188, %c0_189] : memref<1x32x256xf32, #tpu.memory_space<vmem>>, vector<1x8x256xf32>
    %306 = vector.shape_cast %305 : vector<1x8x256xf32> to vector<8x256xf32>
    %307 = vector.shape_cast %304 : vector<8x256xf32> to vector<1x8x256xf32>
    tpu.vector_store %arg10[%c0_187, %c16_188, %c0_189], %307 {strides = array<i32>} : memref<1x32x256xf32, #tpu.memory_space<vmem>>, vector<1x8x256xf32>,
    %c0_190 = arith.constant 0 : index
    %c127_191 = arith.constant 127 : index
    %308 = vector.load %arg13[%c0_190, %c127_191] : memref<4x512xf32, #tpu.memory_space<vmem>>, vector<4x256xf32>
    %cst_192 = arith.constant 0xFF800000 : f32
    %309 = vector.shape_cast %37 : vector<1x256xi1> to vector<1x256xi1>
    %310 = vector.broadcast %309 : vector<1x256xi1> to vector<4x256xi1>
    %311 = vector.broadcast %cst_192 : f32 to vector<4x256xf32>
    %312 = arith.select %310, %308, %311 : vector<4x256xi1>, vector<4x256xf32>
    %c0_193 = arith.constant 0 : index
    %c129_194 = arith.constant 129 : index
    %313 = vector.load %arg13[%c0_193, %c129_194] : memref<4x512xf32, #tpu.memory_space<vmem>>, vector<4x256xf32>
    %cst_195 = arith.constant 0xFF800000 : f32
    %314 = vector.shape_cast %46 : vector<1x256xi1> to vector<1x256xi1>
    %315 = vector.broadcast %314 : vector<1x256xi1> to vector<4x256xi1>
    %316 = vector.broadcast %cst_195 : f32 to vector<4x256xf32>
    %317 = arith.select %315, %313, %316 : vector<4x256xi1>, vector<4x256xf32>
    %318 = arith.maximumf %312, %317 : vector<4x256xf32>
    %319 = arith.maximumf %1, %318 : vector<4x256xf32>
    %c0_196 = arith.constant 0 : index
    %c128_197 = arith.constant 128 : index
    %320 = vector.load %arg13[%c0_196, %c128_197] : memref<4x512xf32, #tpu.memory_space<vmem>>, vector<4x256xf32>
    tpu.vector_store %arg13[%c0_196, %c128_197], %319 {strides = array<i32>} : memref<4x512xf32, #tpu.memory_space<vmem>>, vector<4x256xf32>,
    %c0_198 = arith.constant 0 : index
    %c112_199 = arith.constant 112 : index
    %321 = vector.load %arg13[%c0_198, %c112_199] : memref<4x512xf32, #tpu.memory_space<vmem>>, vector<4x256xf32>
    %c0_200 = arith.constant 0 : index
    %c144_201 = arith.constant 144 : index
    %322 = vector.load %arg13[%c0_200, %c144_201] : memref<4x512xf32, #tpu.memory_space<vmem>>, vector<4x256xf32>
    %323 = arith.maximumf %321, %322 : vector<4x256xf32>
    %324 = arith.maximumf %319, %323 : vector<4x256xf32>
    %c0_202 = arith.constant 0 : index
    %c0_203 = arith.constant 0 : index
    %325 = vector.load %arg8[%c0_202, %c0_203] : memref<8x4xbf16, #tpu.memory_space<vmem>>, vector<8x4xbf16>
    %326 = arith.truncf %324 : vector<4x256xf32> to vector<4x256xbf16>
    %cst_204 = arith.constant dense<0.000000e+00> : vector<8x256xf32>
    %327 = tpu.matmul %325, %326, %cst_204 {dimension_numbers = #tpu.dot_dimension_numbers<[1], [0], [0], [1], [0, 0, 1, 1], [], []>} : vector<8x4xbf16>, vector<4x256xbf16>, vector<8x256xf32> -> vector<8x256xf32>
    %c0_205 = arith.constant 0 : index
    %c0_206 = arith.constant 0 : index
    %328 = vector.load %arg9[%c0_205, %c0_206] : memref<8x1xf32, #tpu.memory_space<vmem>>, vector<8x1xf32>
    %329 = vector.broadcast %328 : vector<8x1xf32> to vector<8x256xf32>
    %330 = arith.addf %327, %329 : vector<8x256xf32>
    %cst_207 = arith.constant 0.000000e+00 : f32
    %331 = vector.broadcast %cst_207 : f32 to vector<8x256xf32>
    %332 = arith.maximumf %330, %331 : vector<8x256xf32>
    %c0_208 = arith.constant 0 : index
    %c24_209 = arith.constant 24 : index
    %c0_210 = arith.constant 0 : index
    %333 = vector.load %arg10[%c0_208, %c24_209, %c0_210] : memref<1x32x256xf32, #tpu.memory_space<vmem>>, vector<1x8x256xf32>
    %334 = vector.shape_cast %333 : vector<1x8x256xf32> to vector<8x256xf32>
    %335 = vector.shape_cast %332 : vector<8x256xf32> to vector<1x8x256xf32>
    tpu.vector_store %arg10[%c0_208, %c24_209, %c0_210], %335 {strides = array<i32>} : memref<1x32x256xf32, #tpu.memory_space<vmem>>, vector<1x8x256xf32>,
    return
  }
  func.func @transform_0(%arg0: i32) -> (i32, i32, i32) {
    %c0_i32 = arith.constant 0 : i32
    %c0_i32_0 = arith.constant 0 : i32
    %c0_i32_1 = arith.constant 0 : i32
    return %arg0, %c0_i32, %c0_i32_0 : i32, i32, i32
  }
  func.func @transform_1(%arg0: i32) -> (i32, i32) {
    %c0_i32 = arith.constant 0 : i32
    %c0_i32_0 = arith.constant 0 : i32
    %c0_i32_1 = arith.constant 0 : i32
    return %c0_i32, %c0_i32_0 : i32, i32
  }
  func.func @transform_2(%arg0: i32) -> (i32, i32) {
    %c0_i32 = arith.constant 0 : i32
    %c0_i32_0 = arith.constant 0 : i32
    %c0_i32_1 = arith.constant 0 : i32
    return %c0_i32, %c0_i32_0 : i32, i32
  }
  func.func @transform_3(%arg0: i32) -> (i32, i32) {
    %c0_i32 = arith.constant 0 : i32
    %c0_i32_0 = arith.constant 0 : i32
    %c0_i32_1 = arith.constant 0 : i32
    return %c0_i32, %c0_i32_0 : i32, i32
  }
  func.func @transform_4(%arg0: i32) -> (i32, i32) {
    %c0_i32 = arith.constant 0 : i32
    %c0_i32_0 = arith.constant 0 : i32
    %c0_i32_1 = arith.constant 0 : i32
    return %c0_i32, %c0_i32_0 : i32, i32
  }
  func.func @transform_5(%arg0: i32) -> (i32, i32) {
    %c0_i32 = arith.constant 0 : i32
    %c0_i32_0 = arith.constant 0 : i32
    %c0_i32_1 = arith.constant 0 : i32
    return %c0_i32, %c0_i32_0 : i32, i32
  }
  func.func @transform_6(%arg0: i32) -> (i32, i32) {
    %c0_i32 = arith.constant 0 : i32
    %c0_i32_0 = arith.constant 0 : i32
    %c0_i32_1 = arith.constant 0 : i32
    return %c0_i32, %c0_i32_0 : i32, i32
  }
  func.func @transform_7(%arg0: i32) -> (i32, i32) {
    %c0_i32 = arith.constant 0 : i32
    %c0_i32_0 = arith.constant 0 : i32
    %c0_i32_1 = arith.constant 0 : i32
    return %c0_i32, %c0_i32_0 : i32, i32
  }
  func.func @transform_8(%arg0: i32) -> (i32, i32) {
    %c0_i32 = arith.constant 0 : i32
    %c0_i32_0 = arith.constant 0 : i32
    %c0_i32_1 = arith.constant 0 : i32
    return %c0_i32, %c0_i32_0 : i32, i32
  }
  func.func @transform_9(%arg0: i32) -> (i32, i32, i32) {
    %c0_i32 = arith.constant 0 : i32
    %c0_i32_0 = arith.constant 0 : i32
    %c0_i32_1 = arith.constant 0 : i32
    return %arg0, %c0_i32, %c0_i32_0 : i32, i32, i32
  }
}

</mosaic_0001>

<llo_original>
// kernel: inception_forward.1
$region0: #{inception_forward.1}
  #allocation0 [shape = 'u32[]', space=smem, size = 0x4, offset = 0x4, fixed_abs, tag = 'smem constant byte address 0x4 - core index']
  #allocation1 [shape = 'u32[144,128]{1,0:T(1,128)}', space=vmem, size = 0x12000, scoped, tag = 'internal scratch']
  #allocation2 [shape = 'bf16[8,512]{1,0:T(8,128)(2,1)}', space=vmem, size = 0x2000, scoped, tag = 'scratch operand']
  #allocation3 [shape = 'bf16[8,512]{1,0:T(8,128)(2,1)}', space=vmem, size = 0x2000, scoped, tag = 'scratch operand']
  #allocation4 [shape = 'f32[4,512]{1,0:T(4,128)}', space=vmem, size = 0x2000, scoped, tag = 'scratch operand']
  #allocation5 [shape = 'bf16[72,256]{1,0:T(8,128)(2,1)}', space=vmem, size = 0x9000, scoped, tag = 'scratch operand']
  #allocation6 [shape = 'bf16[200,256]{1,0:T(8,128)(2,1)}', space=vmem, size = 0x19000, scoped, tag = 'scratch operand']
  %s0 = inlined_call_operand.vmem [shape: f32[2,4,256], index: 0, kind: input, shape index: {}]
  %s1 = inlined_call_operand.vmem [shape: bf16[24,4], index: 1, kind: input, shape index: {}]
  %s2 = inlined_call_operand.vmem [shape: f32[24,1], index: 2, kind: input, shape index: {}]
  %s3 = inlined_call_operand.vmem [shape: bf16[8,72], index: 3, kind: input, shape index: {}]
  %s4 = inlined_call_operand.vmem [shape: f32[8,1], index: 4, kind: input, shape index: {}]
  %s5 = inlined_call_operand.vmem [shape: bf16[8,200], index: 5, kind: input, shape index: {}]
  %s6 = inlined_call_operand.vmem [shape: f32[8,1], index: 6, kind: input, shape index: {}]
  %s7 = inlined_call_operand.vmem [shape: bf16[8,4], index: 7, kind: input, shape index: {}]
  %s8 = inlined_call_operand.vmem [shape: f32[8,1], index: 8, kind: input, shape index: {}]
  %s9 = inlined_call_operand.vmem [shape: f32[2,32,256], index: 9, kind: output, shape index: {}]
  %s10 = sld [smem:[#allocation0]]
  $region69: #{inception_forward.1} parent=0
    _
  %s12 = ssub.s32 1, %s10
  %s13 = scalar_select 0, %s12, %s10
  loop: start=0, step=1, limit=4
  $region2: #{inception_forward.1} parent=0 // loop_pre_header
    _
  $region3: #{inception_forward.1} parent=0 // loop_header
    %s15 = sphi 0, %s19
    %p16 = scmp.ge.s32.totalorder %s15, 4
    %s25 = sphi 0, %s27
    %s28 = sphi 0, %s25
    %s29 = sphi 0, %s28
    %s45 = sphi 0, %s29
    %s49 = sphi 0, %s49
    %s51 = sphi 0, %s49
    %s52 = sphi 0, %s51
    %s66 = sphi 0, %s52
    %s70 = sphi 0, %s70
    %s72 = sphi 0, %s70
    %s73 = sphi 0, %s72
    %s87 = sphi 0, %s73
    %s91 = sphi 0, %s91
    %s93 = sphi 0, %s91
    %s94 = sphi 0, %s93
    %s108 = sphi 0, %s94
    %s112 = sphi 0, %s112
    %s114 = sphi 0, %s112
    %s115 = sphi 0, %s114
    %s129 = sphi 0, %s115
    %s133 = sphi 0, %s133
    %s135 = sphi 0, %s133
    %s136 = sphi 0, %s135
    %s150 = sphi 0, %s136
    %s154 = sphi 0, %s154
    %s156 = sphi 0, %s154
    %s157 = sphi 0, %s156
    %s171 = sphi 0, %s157
    %s175 = sphi 0, %s175
    %s177 = sphi 0, %s175
    %s178 = sphi 0, %s177
    %s192 = sphi 0, %s178
    %s196 = sphi 0, %s196
    %s198 = sphi 0, %s196
    %s199 = sphi 0, %s198
    %s213 = sphi 0, %s199
    %s219 = sphi 0, %s221
    %s222 = sphi 0, %s219
    %s223 = sphi 0, %s222
    %s239 = sphi 0, %s223
  $region4: #{inception_forward.1} parent=0 // loop_header_branch
    %18 = sbr.rel (%p16) target = $region8
  $region5: #{inception_forward.1} parent=0 // loop_body
    %s20 = ssub.s32 %s15, 1
    %s21 = ssub.s32 %s15, 2
    %s22 = sadd.s32 %s15, 1
    %s23 = ssub.s32 %s15, %s22
    %p24 = scmp.eq.s32.totalorder %s23, 0
    %s26 = sadd.s32 %s25, 1
    %s27 = scalar_select %p24, %s25, %s26
    %p30 = pneg %p24
    %p31 = scmp.eq.s32.totalorder %s15, 1
    %p32 = por %p30, %p31
    %p33 = scmp.ne.s32.totalorder %s25, %s28
    %p34 = scmp.eq.s32.totalorder %s15, 0
    %p35 = por %p33, %p34
    %p36 = scmp.ne.s32.totalorder %s25, %s28
    %p37 = scmp.eq.s32.totalorder %s20, 1
    %p38 = por %p36, %p37
    %p39 = scmp.ne.s32.totalorder %s28, %s29
    %p40 = scmp.eq.s32.totalorder %s20, 0
    %p41 = por %p39, %p40
    %p42 = scmp.ne.s32.totalorder %s28, %s29
    %p43 = scmp.eq.s32.totalorder %s21, 1
    %p44 = por %p42, %p43
    %p46 = scmp.ne.s32.totalorder %s29, %s45
    %p47 = scmp.eq.s32.totalorder %s21, 0
    %p48 = por %p46, %p47
    %s50 = sadd.s32 %s49, 1
    %p53 = scmp.eq.s32.totalorder %s15, 1
    %p54 = scmp.ne.s32.totalorder %s49, %s51
    %p55 = scmp.eq.s32.totalorder %s15, 0
    %p56 = por %p54, %p55
    %p57 = scmp.ne.s32.totalorder %s49, %s51
    %p58 = scmp.eq.s32.totalorder %s20, 1
    %p59 = por %p57, %p58
    %p60 = scmp.ne.s32.totalorder %s51, %s52
    %p61 = scmp.eq.s32.totalorder %s20, 0
    %p62 = por %p60, %p61
    %p63 = scmp.ne.s32.totalorder %s51, %s52
    %p64 = scmp.eq.s32.totalorder %s21, 1
    %p65 = por %p63, %p64
    %p67 = scmp.ne.s32.totalorder %s52, %s66
    %p68 = scmp.eq.s32.totalorder %s21, 0
    %p69 = por %p67, %p68
    %s71 = sadd.s32 %s70, 1
    %p74 = scmp.eq.s32.totalorder %s15, 1
    %p75 = scmp.ne.s32.totalorder %s70, %s72
    %p76 = scmp.eq.s32.totalorder %s15, 0
    %p77 = por %p75, %p76
    %p78 = scmp.ne.s32.totalorder %s70, %s72
    %p79 = scmp.eq.s32.totalorder %s20, 1
    %p80 = por %p78, %p79
    %p81 = scmp.ne.s32.totalorder %s72, %s73
    %p82 = scmp.eq.s32.totalorder %s20, 0
    %p83 = por %p81, %p82
    %p84 = scmp.ne.s32.totalorder %s72, %s73
    %p85 = scmp.eq.s32.totalorder %s21, 1
    %p86 = por %p84, %p85
    %p88 = scmp.ne.s32.totalorder %s73, %s87
    %p89 = scmp.eq.s32.totalorder %s21, 0
    %p90 = por %p88, %p89
    %s92 = sadd.s32 %s91, 1
    %p95 = scmp.eq.s32.totalorder %s15, 1
    %p96 = scmp.ne.s32.totalorder %s91, %s93
    %p97 = scmp.eq.s32.totalorder %s15, 0
    %p98 = por %p96, %p97
    %p99 = scmp.ne.s32.totalorder %s91, %s93
    %p100 = scmp.eq.s32.totalorder %s20, 1
    %p101 = por %p99, %p100
    %p102 = scmp.ne.s32.totalorder %s93, %s94
    %p103 = scmp.eq.s32.totalorder %s20, 0
    %p104 = por %p102, %p103
    %p105 = scmp.ne.s32.totalorder %s93, %s94
    %p106 = scmp.eq.s32.totalorder %s21, 1
    %p107 = por %p105, %p106
    %p109 = scmp.ne.s32.totalorder %s94, %s108
    %p110 = scmp.eq.s32.totalorder %s21, 0
    %p111 = por %p109, %p110
    %s113 = sadd.s32 %s112, 1
    %p116 = scmp.eq.s32.totalorder %s15, 1
    %p117 = scmp.ne.s32.totalorder %s112, %s114
    %p118 = scmp.eq.s32.totalorder %s15, 0
    %p119 = por %p117, %p118
    %p120 = scmp.ne.s32.totalorder %s112, %s114
    %p121 = scmp.eq.s32.totalorder %s20, 1
    %p122 = por %p120, %p121
    %p123 = scmp.ne.s32.totalorder %s114, %s115
    %p124 = scmp.eq.s32.totalorder %s20, 0
    %p125 = por %p123, %p124
    %p126 = scmp.ne.s32.totalorder %s114, %s115
    %p127 = scmp.eq.s32.totalorder %s21, 1
    %p128 = por %p126, %p127
    %p130 = scmp.ne.s32.totalorder %s115, %s129
    %p131 = scmp.eq.s32.totalorder %s21, 0
    %p132 = por %p130, %p131
    %s134 = sadd.s32 %s133, 1
    %p137 = scmp.eq.s32.totalorder %s15, 1
    %p138 = scmp.ne.s32.totalorder %s133, %s135
    %p139 = scmp.eq.s32.totalorder %s15, 0
    %p140 = por %p138, %p139
    %p141 = scmp.ne.s32.totalorder %s133, %s135
    %p142 = scmp.eq.s32.totalorder %s20, 1
    %p143 = por %p141, %p142
    %p144 = scmp.ne.s32.totalorder %s135, %s136
    %p145 = scmp.eq.s32.totalorder %s20, 0
    %p146 = por %p144, %p145
    %p147 = scmp.ne.s32.totalorder %s135, %s136
    %p148 = scmp.eq.s32.totalorder %s21, 1
    %p149 = por %p147, %p148
    %p151 = scmp.ne.s32.totalorder %s136, %s150
    %p152 = scmp.eq.s32.totalorder %s21, 0
    %p153 = por %p151, %p152
    %s155 = sadd.s32 %s154, 1
    %p158 = scmp.eq.s32.totalorder %s15, 1
    %p159 = scmp.ne.s32.totalorder %s154, %s156
    %p160 = scmp.eq.s32.totalorder %s15, 0
    %p161 = por %p159, %p160
    %p162 = scmp.ne.s32.totalorder %s154, %s156
    %p163 = scmp.eq.s32.totalorder %s20, 1
    %p164 = por %p162, %p163
    %p165 = scmp.ne.s32.totalorder %s156, %s157
    %p166 = scmp.eq.s32.totalorder %s20, 0
    %p167 = por %p165, %p166
    %p168 = scmp.ne.s32.totalorder %s156, %s157
    %p169 = scmp.eq.s32.totalorder %s21, 1
    %p170 = por %p168, %p169
    %p172 = scmp.ne.s32.totalorder %s157, %s171
    %p173 = scmp.eq.s32.totalorder %s21, 0
    %p174 = por %p172, %p173
    %s176 = sadd.s32 %s175, 1
    %p179 = scmp.eq.s32.totalorder %s15, 1
    %p180 = scmp.ne.s32.totalorder %s175, %s177
    %p181 = scmp.eq.s32.totalorder %s15, 0
    %p182 = por %p180, %p181
    %p183 = scmp.ne.s32.totalorder %s175, %s177
    %p184 = scmp.eq.s32.totalorder %s20, 1
    %p185 = por %p183, %p184
    %p186 = scmp.ne.s32.totalorder %s177, %s178
    %p187 = scmp.eq.s32.totalorder %s20, 0
    %p188 = por %p186, %p187
    %p189 = scmp.ne.s32.totalorder %s177, %s178
    %p190 = scmp.eq.s32.totalorder %s21, 1
    %p191 = por %p189, %p190
    %p193 = scmp.ne.s32.totalorder %s178, %s192
    %p194 = scmp.eq.s32.totalorder %s21, 0
    %p195 = por %p193, %p194
    %s197 = sadd.s32 %s196, 1
    %p200 = scmp.eq.s32.totalorder %s15, 1
    %p201 = scmp.ne.s32.totalorder %s196, %s198
    %p202 = scmp.eq.s32.totalorder %s15, 0
    %p203 = por %p201, %p202
    %p204 = scmp.ne.s32.totalorder %s196, %s198
    %p205 = scmp.eq.s32.totalorder %s20, 1
    %p206 = por %p204, %p205
    %p207 = scmp.ne.s32.totalorder %s198, %s199
    %p208 = scmp.eq.s32.totalorder %s20, 0
    %p209 = por %p207, %p208
    %p210 = scmp.ne.s32.totalorder %s198, %s199
    %p211 = scmp.eq.s32.totalorder %s21, 1
    %p212 = por %p210, %p211
    %p214 = scmp.ne.s32.totalorder %s199, %s213
    %p215 = scmp.eq.s32.totalorder %s21, 0
    %p216 = por %p214, %p215
    %s217 = ssub.s32 %s15, %s22
    %p218 = scmp.eq.s32.totalorder %s217, 0
    %s220 = sadd.s32 %s219, 1
    %s221 = scalar_select %p218, %s219, %s220
    %p224 = pneg %p218
    %p225 = scmp.eq.s32.totalorder %s15, 1
    %p226 = por %p224, %p225
    %p227 = scmp.ne.s32.totalorder %s219, %s222
    %p228 = scmp.eq.s32.totalorder %s15, 0
    %p229 = por %p227, %p228
    %p230 = scmp.ne.s32.totalorder %s219, %s222
    %p231 = scmp.eq.s32.totalorder %s20, 1
    %p232 = por %p230, %p231
    %p233 = scmp.ne.s32.totalorder %s222, %s223
    %p234 = scmp.eq.s32.totalorder %s20, 0
    %p235 = por %p233, %p234
    %p236 = scmp.ne.s32.totalorder %s222, %s223
    %p237 = scmp.eq.s32.totalorder %s21, 1
    %p238 = por %p236, %p237
    %p240 = scmp.ne.s32.totalorder %s223, %s239
    %p241 = scmp.eq.s32.totalorder %s21, 0
    %p242 = por %p240, %p241
    %p243 = scmp.le.s32.totalorder 1, %s15
    %p244 = scmp.lt.s32.totalorder %s15, 3
    %p245 = pnand %p243, %p244
    %p246 = pneg %p245
    // Predicated region
    $region9: #{inception_forward.1} parent=5 // pred_check
      _
    $region10: #{inception_forward.1} parent=5 // pred_check_branch
      %248 = sbr.rel (%p245) target = $region12
    $region11: #{inception_forward.1} parent=5 // pred_region
      %s249 = ssub.s32 %s15, 1
      // Predicated region
      $region13: #{inception_forward.1} parent=11 // pred_check
        %p250 = pneg %p62
      $region14: #{inception_forward.1} parent=11 // pred_check_branch
        %252 = sbr.rel (%p250) target = $region16
      $region15: #{inception_forward.1} parent=11 // pred_region
        _
      $region16: #{inception_forward.1} parent=11 // pred_fallthru
        _
      // Predicated region
      $region17: #{inception_forward.1} parent=11 // pred_check
        %p253 = pneg %p83
      $region18: #{inception_forward.1} parent=11 // pred_check_branch
        %255 = sbr.rel (%p253) target = $region20
      $region19: #{inception_forward.1} parent=11 // pred_region
        _
      $region20: #{inception_forward.1} parent=11 // pred_fallthru
        _
      // Predicated region
      $region21: #{inception_forward.1} parent=11 // pred_check
        %p256 = pneg %p104
      $region22: #{inception_forward.1} parent=11 // pred_check_branch
        %258 = sbr.rel (%p256) target = $region24
      $region23: #{inception_forward.1} parent=11 // pred_region
        _
      $region24: #{inception_forward.1} parent=11 // pred_fallthru
        _
      // Predicated region
      $region25: #{inception_forward.1} parent=11 // pred_check
        %p259 = pneg %p125
      $region26: #{inception_forward.1} parent=11 // pred_check_branch
        %261 = sbr.rel (%p259) target = $region28
      $region27: #{inception_forward.1} parent=11 // pred_region
        _
      $region28: #{inception_forward.1} parent=11 // pred_fallthru
        _
      // Predicated region
      $region29: #{inception_forward.1} parent=11 // pred_check
        %p262 = pneg %p146
      $region30: #{inception_forward.1} parent=11 // pred_check_branch
        %264 = sbr.rel (%p262) target = $region32
      $region31: #{inception_forward.1} parent=11 // pred_region
        _
      $region32: #{inception_forward.1} parent=11 // pred_fallthru
        _
      // Predicated region
      $region33: #{inception_forward.1} parent=11 // pred_check
        %p265 = pneg %p167
      $region34: #{inception_forward.1} parent=11 // pred_check_branch
        %267 = sbr.rel (%p265) target = $region36
      $region35: #{inception_forward.1} parent=11 // pred_region
        _
      $region36: #{inception_forward.1} parent=11 // pred_fallthru
        _
      // Predicated region
      $region37: #{inception_forward.1} parent=11 // pred_check
        %p268 = pneg %p188
      $region38: #{inception_forward.1} parent=11 // pred_check_branch
        %270 = sbr.rel (%p268) target = $region40
      $region39: #{inception_forward.1} parent=11 // pred_region
        _
      $region40: #{inception_forward.1} parent=11 // pred_fallthru
        _
      // Predicated region
      $region41: #{inception_forward.1} parent=11 // pred_check
        %p271 = pneg %p209
      $region42: #{inception_forward.1} parent=11 // pred_check_branch
        %273 = sbr.rel (%p271) target = $region44
      $region43: #{inception_forward.1} parent=11 // pred_region
        _
      $region44: #{inception_forward.1} parent=11 // pred_fallthru
        _
    $region12: #{inception_forward.1} parent=5 // pred_fallthru
      _
    %p274 = scmp.lt.s32.totalorder %s15, 2
    // Predicated region
    $region45: #{inception_forward.1} parent=5 // pred_check
      %p275 = pneg %p274
    $region46: #{inception_forward.1} parent=5 // pred_check_branch
      %277 = sbr.rel (%p275) target = $region48
    $region47: #{inception_forward.1} parent=5 // pred_region
      // Predicated region
      $region49: #{inception_forward.1} parent=47 // pred_check
        %p278 = pneg %p35
      $region50: #{inception_forward.1} parent=47 // pred_check_branch
        %280 = sbr.rel (%p278) target = $region52
      $region51: #{inception_forward.1} parent=47 // pred_region
        %p281 = scmp.lt.s32.totalorder %s15, 1
        %s282 = scalar_select %p281, %s15, 1
        %s283 = smul.addr %s282, 2
        %s284 = smul.addr %s283, 4
        %s285 = scalar_lea.vmem %s0, %s284
      $region52: #{inception_forward.1} parent=47 // pred_fallthru
        _
    $region48: #{inception_forward.1} parent=5 // pred_fallthru
      _
    %p286 = scmp.le.s32.totalorder 1, %s15
    %p287 = scmp.lt.s32.totalorder %s15, 3
    %p288 = pnand %p286, %p287
    %p289 = pneg %p288
    // Predicated region
    $region53: #{inception_forward.1} parent=5 // pred_check
      _
    $region54: #{inception_forward.1} parent=5 // pred_check_branch
      %291 = sbr.rel (%p288) target = $region56
    $region55: #{inception_forward.1} parent=5 // pred_region
      %s292 = ssub.s32 %s15, 1
      %p293 = scmp.lt.s32.totalorder %s20, 1
      %s294 = scalar_select %p293, %s20, 1
      %s295 = smul.addr %s294, 2
      %s296 = smul.addr %s295, 4
      %s297 = scalar_lea.vmem %s0, %s296
      %p298 = pneg %p41
      %p299 = pneg %p38
      %p300 = pneg %p62
      %p301 = pneg %p59
      %p302 = pneg %p83
      %p303 = pneg %p80
      %p304 = pneg %p104
      %p305 = pneg %p101
      %p306 = pneg %p125
      %p307 = pneg %p122
      %p308 = pneg %p146
      %p309 = pneg %p143
      %p310 = pneg %p167
      %p311 = pneg %p164
      %p312 = pneg %p188
      %p313 = pneg %p185
      %p314 = pneg %p209
      %p315 = pneg %p206
      %p316 = pneg %p235
      %p317 = pneg %p232
      %p318 = scmp.lt.s32.totalorder %s20, 1
      %s319 = scalar_select %p318, %s20, 1
      %s320 = smul.addr %s319, 8
      %s321 = smul.addr %s320, 8
      %s322 = scalar_lea.vmem %s9, %s321
      %p323 = scmp.lt.s32.totalorder %s20, 1
      %s324 = scalar_select %p323, %s20, 1
      %s325 = smul.addr %s324, 2
      %s326 = smul.addr %s325, 4
      %s327 = scalar_lea.vmem %s0, %s326
      %p328 = scmp.lt.s32.totalorder %s20, 1
      %s329 = scalar_select %p328, %s20, 1
      %s330 = smul.addr %s329, 8
      %s331 = smul.addr %s330, 8
      %s332 = scalar_lea.vmem %s9, %s331
      %v336 = vld [vmem:[%s327] sm:$0xff]
      %v338 = vcombine.high %v336, %v336
      %v340 = vpack.c.bf16 %v336, %v336
      %v341 = vpack.c.bf16 %v338, %v338
      %v342 = vlaneseq
      %v343 = vand.u32 %v342, 127
      %v344 = vadd.s32 %v343, 128
      %vm345 = vcmp.lt.s32.totalorder %v343, 0
      %v346 = vsub.s32 0, %v343
      %v347 = vsel %vm345, %v346, %v343
      %v348 = vshrl.u32 %v347, 4
      %v349 = vand.u32 %v347, 15
      %v350 = vsub.s32 0, %v349
      %v351 = vsel %vm345, %v350, %v349
      %vm352 = vcmp.lt.s32.totalorder %v344, 0
      %v353 = vsub.s32 0, %v344
      %v354 = vsel %vm352, %v353, %v344
      %v355 = vshrl.u32 %v354, 4
      %v356 = vand.u32 %v354, 15
      %v357 = vsub.s32 0, %v356
      %v358 = vsel %vm352, %v357, %v356
      %vm359 = vcmp.ne.s32.totalorder %v351, 0
      %vm360 = vcmp.ne.s32.totalorder %v358, 0
      %vm361 = vcmp.lt.s32.totalorder %v351, 0
      %vm362 = vcmp.lt.s32.totalorder %v358, 0
      %vm363 = vmand %vm361, %vm359
      %vm364 = vmand %vm362, %vm360
      %v365 = vadd.s32 %v351, 16
      %v366 = vadd.s32 %v358, 16
      %v367 = vsel %vm363, %v365, %v351
      %v368 = vsel %vm364, %v366, %v358
      %v369 = vadd.s32 %v367, 4294967294
      %v370 = vadd.s32 %v368, 4294967294
      %vm371 = vcmp.ge.s32.totalorder %v369, 0
      %vm372 = vcmp.ge.s32.totalorder %v370, 0
      %vm373 = vcmp.lt.s32.totalorder %v369, 16
      %vm374 = vcmp.lt.s32.totalorder %v370, 16
      %vm375 = vmand %vm371, %vm373
      %vm376 = vmand %vm372, %vm374
      %v377 = vadd.s32 %v367, 4294967295
      %v378 = vadd.s32 %v368, 4294967295
      %vm379 = vcmp.ge.s32.totalorder %v377, 0
      %vm380 = vcmp.ge.s32.totalorder %v378, 0
      %vm381 = vcmp.lt.s32.totalorder %v377, 16
      %vm382 = vcmp.lt.s32.totalorder %v378, 16
      %vm383 = vmand %vm379, %vm381
      %vm384 = vmand %vm380, %vm382
      %v385 = vadd.s32 %v367, 1
      %v386 = vadd.s32 %v368, 1
      %vm387 = vcmp.ge.s32.totalorder %v385, 0
      %vm388 = vcmp.ge.s32.totalorder %v386, 0
      %vm389 = vcmp.lt.s32.totalorder %v385, 16
      %vm390 = vcmp.lt.s32.totalorder %v386, 16
      %vm391 = vmand %vm387, %vm389
      %vm392 = vmand %vm388, %vm390
      %v393 = vadd.s32 %v367, 2
      %v394 = vadd.s32 %v368, 2
      %vm395 = vcmp.ge.s32.totalorder %v393, 0
      %vm396 = vcmp.ge.s32.totalorder %v394, 0
      %vm397 = vcmp.lt.s32.totalorder %v393, 16
      %vm398 = vcmp.lt.s32.totalorder %v394, 16
      %vm399 = vmand %vm395, %vm397
      %vm400 = vmand %vm396, %vm398
      %401 = vst [vmem:[#allocation2] sm:$0xf] 0
      %402 = vst [vmem:[#allocation2 + $0xc] sm:$0xf] 0
      %403 = vst [vmem:[#allocation3] sm:$0xf] 0
      %404 = vst [vmem:[#allocation3 + $0xc] sm:$0xf] 0
      %405 = vst [vmem:[#allocation4] sm:$0xf] -inf
      %406 = vst [vmem:[#allocation4 + $0xc] sm:$0xf] -inf
      %v407 = vld [vmem:[%s1] sm:$0xf]
      %v408 = vld [vmem:[%s1 + $0x4] sm:$0xf]
      %v409 = vld [vmem:[%s1 + $0x8] sm:$0xf]
      %v410 = vld [vmem:[%s2] sm:$0xff]
      %v411 = vld [vmem:[%s2 + $0x8] sm:$0xff]
      %v412 = vld [vmem:[%s2 + $0x10] sm:$0xff]
      %414 = vset.pattern.permute.xlu0 0
      %415 = vperm.xlu0 %414, %v410
      %v416 = vpop.permute.xlu0 %415
      %419 = vset.pattern.permute.xlu0 0
      %420 = vperm.xlu0 %419, %v411
      %v421 = vpop.permute.xlu0 %420
      %424 = vset.pattern.permute.xlu0 0
      %425 = vperm.xlu0 %424, %v412
      %v426 = vpop.permute.xlu0 %425
      %v431 = vunpack.c.l.b16 %v407
      %v432 = vunpack.c.l.b16 %v408
      %v433 = vunpack.c.l.b16 %v409
      %v434 = vpack.c.b16 %v432, %v431
      %v435 = vpack.c.b16 %v433, %v433
      %vm436 = vcmask 31744
      %v438 = vsel %vm436, %v434, 0
      %v441 = vsel %vm436, %v435, 0
      %vm443 = vcmask 1041408
      %v445 = vsel %vm443, %v340, 0
      %v448 = vsel %vm443, %v341, 0
      %450 = vmatprep.subr.bf16.mxu0 %v448
      %451 = vmatpush1.bf16.msra.mxu0 %v445
      %452 = vmatprep.subr.bf16.mxu0 0
      %453 = vmatpush1.bf16.msra.mxu0 0
      %454 = vmatprep.subr.bf16.mxu0 0
      %455 = vmatpush1.bf16.msra.mxu0 0
      %456 = vmatprep.subr.bf16.mxu0 0
      %457 = vmatpush1.bf16.msra.mxu0 0
      %458 = vmatprep.subr.bf16.mxu0 0
      %459 = vmatpush1.bf16.msra.mxu0 0
      %460 = vmatprep.subr.bf16.mxu0 0
      %461 = vmatpush1.bf16.msra.mxu0 0
      %462 = vmatprep.subr.bf16.mxu0 0
      %463 = vmatpush1.bf16.msra.mxu0 0
      %464 = vmatprep.subr.bf16.mxu0 0
      %465 = vmatpush1.bf16.msra.mxu0 0
      %466 = vmatprep.subr.bf16.mxu0 0
      %467 = vmatpush1.bf16.msra.mxu0 0
      %468 = vmatprep.subr.bf16.mxu0 0
      %469 = vmatpush1.bf16.msra.mxu0 0
      %470 = vmatprep.subr.bf16.mxu0 0
      %471 = vmatpush1.bf16.msra.mxu0 0
      %472 = vmatprep.subr.bf16.mxu0 0
      %473 = vmatpush1.bf16.msra.mxu0 0
      %474 = vmatprep.subr.bf16.mxu0 0
      %475 = vmatpush1.bf16.msra.mxu0 0
      %476 = vmatprep.subr.bf16.mxu0 0
      %477 = vmatpush1.bf16.msra.mxu0 0
      %478 = vmatprep.subr.bf16.mxu0 0
      %479 = vmatpush1.bf16.msra.mxu0 0
      %480 = vmatprep.subr.bf16.mxu0 0
      %481 = vmatpush1.bf16.msra.mxu0 0
      %482 = vmatprep.mubr.bf16.mxu0 0
      %483 = vmatmul.mubr.bf16.gmra.mrb[0].mxu0 %v438
      %v484 = vpop.f32.mrb[0].mxu0
      %v485 = vadd.f32 %v416, %v484
      %v486 = vpop.f32.mrb[0].mxu0
      %v487 = vadd.f32 %v416, %v486
      %v488 = vpop.f32.mrb[0].mxu0
      %v489 = vadd.f32 %v421, %v488
      %v490 = vpop.f32.mrb[0].mxu0
      %v491 = vadd.f32 %v421, %v490
      %492 = vmatprep.mubr.bf16.mxu0 0
      %493 = vmatmul.mubr.bf16.gmra.mrb[0].mxu0 %v441
      %v494 = vpop.f32.mrb[0].mxu0
      %v495 = vadd.f32 %v426, %v494
      %v496 = vpop.f32.mrb[0].mxu0
      %v497 = vadd.f32 %v426, %v496
      %v498 = vpop.f32.mrb[0].mxu0
      %v499 = vpop.f32.mrb[0].mxu0
      %500 = vdwg.mxu0
      %501 = vst [vmem:[%s332] sm:$0xff] %v485
      %502 = vst [vmem:[%s332 + $0x8] sm:$0xff] %v487
      %v503 = vmax.f32 %v489, 0.0
      %v504 = vmax.f32 %v491, 0.0
      %v505 = vpack.c.bf16 %v503, %v503
      %v506 = vpack.c.bf16 %v504, %v504
      %v509 = vunpack.c.l.b16 %v505
      %v510 = vunpack.c.l.b16 %v506
      %v511 = vpack.c.b16 %v510, %v509
      %513 = vst [vmem:[#allocation2 + $0x4] sm:$0xff] %v511
      %v514 = vmax.f32 %v495, 0.0
      %v515 = vmax.f32 %v497, 0.0
      %v516 = vpack.c.bf16 %v514, %v514
      %v517 = vpack.c.bf16 %v515, %v515
      %v520 = vunpack.c.l.b16 %v516
      %v521 = vunpack.c.l.b16 %v517
      %v522 = vpack.c.b16 %v521, %v520
      %524 = vst [vmem:[#allocation3 + $0x4] sm:$0xff] %v522
      %525 = vst [vmem:[#allocation4 + $0x4] sm:$0xff] %v336
      %v526 = vld [vmem:[#allocation2] sm:$0xff]
      %v527 = vld [vmem:[#allocation2 + $0x8] sm:$0xf]
      %v528 = vsel %vm383, 1, 0
      %v529 = vsel %vm384, 1, 0
      %vm530 = vcmp.eq.s32.totalorder %v528, 1
      %vm531 = vcmp.eq.s32.totalorder %v529, 1
      %vm532 = vmpackc.low %vm531, %vm530
      %v533 = vsel %vm532, 65537, 0
      %534 = vrot.lane.b32.xlu0 %v533, 111
      %v535 = vpop.permute.xlu0 %534
      %v536 = vrot.slane %v535, 4
      %vm537 = vcmask 908288
      %v538 = vsel %vm537, %v536, %v535
      %vm539 = vcmp.ne.s16.totalorder %v538, 0
      %vm540 = vcmp.ne.s16.totalorder %v536, 0
      %v541 = vsel %vm539, %v526, 0
      %v542 = vsel %vm540, %v527, 0
      %545 = vrot.lane.b32.xlu0 %v541, 17
      %v546 = vpop.permute.xlu0 %545
      %547 = vrot.lane.b32.xlu0 %v542, 17
      %v548 = vpop.permute.xlu0 %547
      %v549 = vrot.slane %v546, 4
      %v550 = vrot.slane %v548, 4
      %vm551 = vcmask 1043456
      %v552 = vsel %vm551, %v549, %v550
      %vm553 = vcmask 138240
      %v554 = vsel %vm553, %v546, %v552
      %556 = vst [vmem:[#allocation5] sm:$0xff] %v554
      %v557 = vld [vmem:[#allocation2] sm:$0xff]
      %v558 = vld [vmem:[#allocation2 + $0x8] sm:$0xf]
      %561 = vrot.lane.b32.xlu0 %v557, 16
      %v562 = vpop.permute.xlu0 %561
      %563 = vrot.lane.b32.xlu0 %v558, 16
      %v564 = vpop.permute.xlu0 %563
      %v565 = vrot.slane %v562, 4
      %v566 = vrot.slane %v564, 4
      %v567 = vsel %vm551, %v565, %v566
      %vm568 = vcmask 130048
      %v569 = vsel %vm568, %v562, %v567
      %571 = vst [vmem:[#allocation5 + $0x8] sm:$0xff] %v569
      %v572 = vld [vmem:[#allocation2] sm:$0xff]
      %v573 = vld [vmem:[#allocation2 + $0x8] sm:$0xf]
      %v574 = vsel %vm391, 1, 0
      %v575 = vsel %vm392, 1, 0
      %vm576 = vcmp.eq.s32.totalorder %v574, 1
      %vm577 = vcmp.eq.s32.totalorder %v575, 1
      %vm578 = vmpackc.low %vm577, %vm576
      %v579 = vsel %vm578, 65537, 0
      %580 = vrot.lane.b32.xlu0 %v579, 113
      %v581 = vpop.permute.xlu0 %580
      %v582 = vrot.slane %v581, 4
      %vm583 = vcmask 924672
      %v584 = vsel %vm583, %v582, %v581
      %vm585 = vcmp.ne.s16.totalorder %v584, 0
      %vm586 = vcmp.ne.s16.totalorder %v582, 0
      %v587 = vsel %vm585, %v572, 0
      %v588 = vsel %vm586, %v573, 0
      %591 = vrot.lane.b32.xlu0 %v587, 15
      %v592 = vpop.permute.xlu0 %591
      %593 = vrot.lane.b32.xlu0 %v588, 15
      %v594 = vpop.permute.xlu0 %593
      %v595 = vrot.slane %v592, 4
      %v596 = vrot.slane %v594, 4
      %v597 = vsel %vm551, %v595, %v596
      %vm598 = vcmask 121856
      %v599 = vsel %vm598, %v592, %v597
      %601 = vst [vmem:[#allocation5 + $0x10] sm:$0xff] %v599
      %v602 = vld [vmem:[#allocation2] sm:$0xff]
      %v603 = vld [vmem:[#allocation2 + $0x8] sm:$0xf]
      %604 = vrot.lane.b32.xlu0 %v533, 127
      %v605 = vpop.permute.xlu0 %604
      %v606 = vrot.slane %v605, 4
      %vm607 = vcmask 1039360
      %v608 = vsel %vm607, %v606, %v605
      %vm609 = vcmp.ne.s16.totalorder %v608, 0
      %vm610 = vcmp.ne.s16.totalorder %v606, 0
      %v611 = vsel %vm609, %v602, 0
      %v612 = vsel %vm610, %v603, 0
      %615 = vrot.lane.b32.xlu0 %v611, 1
      %v616 = vpop.permute.xlu0 %615
      %617 = vrot.lane.b32.xlu0 %v612, 1
      %v618 = vpop.permute.xlu0 %617
      %v619 = vrot.slane %v616, 4
      %v620 = vrot.slane %v618, 4
      %v621 = vsel %vm551, %v619, %v620
      %vm622 = vcmask 7168
      %v623 = vsel %vm622, %v616, %v621
      %625 = vst [vmem:[#allocation5 + $0x18] sm:$0xff] %v623
      %v626 = vld [vmem:[#allocation2 + $0x4] sm:$0xff]
      %627 = vst [vmem:[#allocation5 + $0x20] sm:$0xff] %v626
      %v628 = vld [vmem:[#allocation2 + $0x4] sm:$0xff]
      %v629 = vld [vmem:[#allocation2 + $0xc] sm:$0xf]
      %630 = vrot.lane.b32.xlu0 %v579, 1
      %v631 = vpop.permute.xlu0 %630
      %v632 = vrot.slane %v631, 4
      %v633 = vsel %vm622, %v632, %v631
      %vm634 = vcmp.ne.s16.totalorder %v633, 0
      %vm635 = vcmp.ne.s16.totalorder %v632, 0
      %v636 = vsel %vm634, %v628, 0
      %v637 = vsel %vm635, %v629, 0
      %640 = vrot.lane.b32.xlu0 %v636, 127
      %v641 = vpop.permute.xlu0 %640
      %642 = vrot.lane.b32.xlu0 %v637, 127
      %v643 = vpop.permute.xlu0 %642
      %v644 = vrot.slane %v641, 4
      %v645 = vrot.slane %v643, 4
      %v646 = vsel %vm551, %v644, %v645
      %v647 = vsel %vm607, %v641, %v646
      %649 = vst [vmem:[#allocation5 + $0x28] sm:$0xff] %v647
      %v650 = vld [vmem:[#allocation2 + $0x4] sm:$0xff]
      %v651 = vld [vmem:[#allocation2 + $0xc] sm:$0xf]
      %652 = vrot.lane.b32.xlu0 %v533, 15
      %v653 = vpop.permute.xlu0 %652
      %v654 = vrot.slane %v653, 4
      %v655 = vsel %vm598, %v654, %v653
      %vm656 = vcmp.ne.s16.totalorder %v655, 0
      %vm657 = vcmp.ne.s16.totalorder %v654, 0
      %v658 = vsel %vm656, %v650, 0
      %v659 = vsel %vm657, %v651, 0
      %662 = vrot.lane.b32.xlu0 %v658, 113
      %v663 = vpop.permute.xlu0 %662
      %664 = vrot.lane.b32.xlu0 %v659, 113
      %v665 = vpop.permute.xlu0 %664
      %v666 = vrot.slane %v663, 4
      %v667 = vrot.slane %v665, 4
      %v668 = vsel %vm551, %v666, %v667
      %v669 = vsel %vm583, %v663, %v668
      %671 = vst [vmem:[#allocation5 + $0x30] sm:$0xff] %v669
      %v672 = vld [vmem:[#allocation2 + $0x4] sm:$0xff]
      %v673 = vld [vmem:[#allocation2 + $0xc] sm:$0xf]
      %676 = vrot.lane.b32.xlu0 %v672, 112
      %v677 = vpop.permute.xlu0 %676
      %678 = vrot.lane.b32.xlu0 %v673, 112
      %v679 = vpop.permute.xlu0 %678
      %v680 = vrot.slane %v677, 4
      %v681 = vrot.slane %v679, 4
      %v682 = vsel %vm551, %v680, %v681
      %vm683 = vcmask 916480
      %v684 = vsel %vm683, %v677, %v682
      %686 = vst [vmem:[#allocation5 + $0x38] sm:$0xff] %v684
      %v687 = vld [vmem:[#allocation2 + $0x4] sm:$0xff]
      %v688 = vld [vmem:[#allocation2 + $0xc] sm:$0xf]
      %689 = vrot.lane.b32.xlu0 %v579, 17
      %v690 = vpop.permute.xlu0 %689
      %v691 = vrot.slane %v690, 4
      %v692 = vsel %vm553, %v691, %v690
      %vm693 = vcmp.ne.s16.totalorder %v692, 0
      %vm694 = vcmp.ne.s16.totalorder %v691, 0
      %v695 = vsel %vm693, %v687, 0
      %v696 = vsel %vm694, %v688, 0
      %699 = vrot.lane.b32.xlu0 %v695, 111
      %v700 = vpop.permute.xlu0 %699
      %701 = vrot.lane.b32.xlu0 %v696, 111
      %v702 = vpop.permute.xlu0 %701
      %v703 = vrot.slane %v700, 4
      %v704 = vrot.slane %v702, 4
      %v705 = vsel %vm551, %v703, %v704
      %v706 = vsel %vm537, %v700, %v705
      %708 = vst [vmem:[#allocation5 + $0x40] sm:$0xff] %v706
      %v709 = vld [vmem:[%s3] sm:$0xf]
      %v710 = vld [vmem:[#allocation5] sm:$0xff]
      %v711 = vld [vmem:[#allocation5 + $0x8] sm:$0xff]
      %v712 = vld [vmem:[#allocation5 + $0x10] sm:$0xff]
      %v713 = vld [vmem:[#allocation5 + $0x18] sm:$0xff]
      %v714 = vld [vmem:[#allocation5 + $0x20] sm:$0xff]
      %v715 = vld [vmem:[#allocation5 + $0x28] sm:$0xff]
      %v716 = vld [vmem:[#allocation5 + $0x30] sm:$0xff]
      %v717 = vld [vmem:[#allocation5 + $0x38] sm:$0xff]
      %v718 = vld [vmem:[#allocation5 + $0x40] sm:$0xff]
      %v719 = vld [vmem:[%s4] sm:$0xff]
      %721 = vset.pattern.permute.xlu0 0
      %722 = vperm.xlu0 %721, %v719
      %v723 = vpop.permute.xlu0 %722
      %v734 = vunpack.c.l.b16 %v710
      %v735 = vunpack.c.h.b16 %v710
      %v736 = vunpack.c.l.b16 %v711
      %v737 = vunpack.c.h.b16 %v711
      %v738 = vunpack.c.l.b16 %v712
      %v739 = vunpack.c.h.b16 %v712
      %v740 = vunpack.c.l.b16 %v713
      %v741 = vunpack.c.h.b16 %v713
      %v742 = vunpack.c.l.b16 %v714
      %v743 = vunpack.c.h.b16 %v714
      %v744 = vunpack.c.l.b16 %v715
      %v745 = vunpack.c.h.b16 %v715
      %v746 = vunpack.c.l.b16 %v716
      %v747 = vunpack.c.h.b16 %v716
      %v748 = vunpack.c.l.b16 %v717
      %v749 = vunpack.c.h.b16 %v717
      %v750 = vunpack.c.l.b16 %v718
      %v751 = vunpack.c.h.b16 %v718
      %v752 = vpack.c.b16 %v736, %v734
      %v753 = vpack.c.b16 %v737, %v735
      %v754 = vpack.c.b16 %v740, %v738
      %v755 = vpack.c.b16 %v741, %v739
      %v756 = vpack.c.b16 %v744, %v742
      %v757 = vpack.c.b16 %v745, %v743
      %v758 = vpack.c.b16 %v748, %v746
      %v759 = vpack.c.b16 %v749, %v747
      %v760 = vpack.c.b16 %v750, %v750
      %v761 = vpack.c.b16 %v751, %v751
      %vm770 = vcmask 588800
      %v772 = vsel %vm770, %v709, 0
      %vm774 = vcmask 1043456
      %v776 = vsel %vm774, %v760, 0
      %v779 = vsel %vm774, %v761, 0
      %781 = vmatprep.subr.bf16.mxu0 %v753
      %782 = vmatpush1.bf16.msra.mxu0 %v752
      %783 = vmatprep.subr.bf16.mxu0 %v755
      %784 = vmatpush1.bf16.msra.mxu0 %v754
      %785 = vmatprep.subr.bf16.mxu0 %v757
      %786 = vmatpush1.bf16.msra.mxu0 %v756
      %787 = vmatprep.subr.bf16.mxu0 %v759
      %788 = vmatpush1.bf16.msra.mxu0 %v758
      %789 = vmatprep.subr.bf16.mxu0 %v779
      %790 = vmatpush1.bf16.msra.mxu0 %v776
      %791 = vmatprep.subr.bf16.mxu0 0
      %792 = vmatpush1.bf16.msra.mxu0 0
      %793 = vmatprep.subr.bf16.mxu0 0
      %794 = vmatpush1.bf16.msra.mxu0 0
      %795 = vmatprep.subr.bf16.mxu0 0
      %796 = vmatpush1.bf16.msra.mxu0 0
      %797 = vmatprep.subr.bf16.mxu0 0
      %798 = vmatpush1.bf16.msra.mxu0 0
      %799 = vmatprep.subr.bf16.mxu0 0
      %800 = vmatpush1.bf16.msra.mxu0 0
      %801 = vmatprep.subr.bf16.mxu0 0
      %802 = vmatpush1.bf16.msra.mxu0 0
      %803 = vmatprep.subr.bf16.mxu0 0
      %804 = vmatpush1.bf16.msra.mxu0 0
      %805 = vmatprep.subr.bf16.mxu0 0
      %806 = vmatpush1.bf16.msra.mxu0 0
      %807 = vmatprep.subr.bf16.mxu0 0
      %808 = vmatpush1.bf16.msra.mxu0 0
      %809 = vmatprep.subr.bf16.mxu0 0
      %810 = vmatpush1.bf16.msra.mxu0 0
      %811 = vmatprep.subr.bf16.mxu0 0
      %812 = vmatpush1.bf16.msra.mxu0 0
      %813 = vmatprep.mubr.bf16.mxu0 0
      %814 = vmatmul.mubr.bf16.gmra.mrb[0].mxu0 %v772
      %v815 = vpop.f32.mrb[0].mxu0
      %v816 = vadd.f32 %v723, %v815
      %v817 = vpop.f32.mrb[0].mxu0
      %v818 = vadd.f32 %v723, %v817
      %v819 = vpop.f32.mrb[0].mxu0
      %v820 = vpop.f32.mrb[0].mxu0
      %821 = vdwg.mxu0
      %v822 = vmax.f32 %v816, 0.0
      %v823 = vmax.f32 %v818, 0.0
      %824 = vst [vmem:[%s332 + $0x10] sm:$0xff] %v822
      %825 = vst [vmem:[%s332 + $0x18] sm:$0xff] %v823
      %v826 = vld [vmem:[#allocation3] sm:$0xff]
      %v827 = vld [vmem:[#allocation3 + $0x8] sm:$0xf]
      %v828 = vsel %vm375, 1, 0
      %v829 = vsel %vm376, 1, 0
      %vm830 = vcmp.eq.s32.totalorder %v828, 1
      %vm831 = vcmp.eq.s32.totalorder %v829, 1
      %vm832 = vmpackc.low %vm831, %vm830
      %v833 = vsel %vm832, 65537, 0
      %834 = vrot.lane.b32.xlu0 %v833, 94
      %v835 = vpop.permute.xlu0 %834
      %v836 = vrot.slane %v835, 4
      %vm837 = vcmask 769024
      %v838 = vsel %vm837, %v836, %v835
      %vm839 = vcmp.ne.s16.totalorder %v838, 0
      %vm840 = vcmp.ne.s16.totalorder %v836, 0
      %v841 = vsel %vm839, %v826, 0
      %v842 = vsel %vm840, %v827, 0
      %845 = vrot.lane.b32.xlu0 %v841, 34
      %v846 = vpop.permute.xlu0 %845
      %847 = vrot.lane.b32.xlu0 %v842, 34
      %v848 = vpop.permute.xlu0 %847
      %v849 = vrot.slane %v846, 4
      %v850 = vrot.slane %v848, 4
      %v851 = vsel %vm551, %v849, %v850
      %vm852 = vcmask 277504
      %v853 = vsel %vm852, %v846, %v851
      %855 = vst [vmem:[#allocation6] sm:$0xff] %v853
      %v856 = vld [vmem:[#allocation3] sm:$0xff]
      %v857 = vld [vmem:[#allocation3 + $0x8] sm:$0xf]
      %858 = vrot.lane.b32.xlu0 %v533, 95
      %v859 = vpop.permute.xlu0 %858
      %v860 = vrot.slane %v859, 4
      %vm861 = vcmask 777216
      %v862 = vsel %vm861, %v860, %v859
      %vm863 = vcmp.ne.s16.totalorder %v862, 0
      %vm864 = vcmp.ne.s16.totalorder %v860, 0
      %v865 = vsel %vm863, %v856, 0
      %v866 = vsel %vm864, %v857, 0
      %869 = vrot.lane.b32.xlu0 %v865, 33
      %v870 = vpop.permute.xlu0 %869
      %871 = vrot.lane.b32.xlu0 %v866, 33
      %v872 = vpop.permute.xlu0 %871
      %v873 = vrot.slane %v870, 4
      %v874 = vrot.slane %v872, 4
      %v875 = vsel %vm551, %v873, %v874
      %vm876 = vcmask 269312
      %v877 = vsel %vm876, %v870, %v875
      %879 = vst [vmem:[#allocation6 + $0x8] sm:$0xff] %v877
      %v880 = vld [vmem:[#allocation3] sm:$0xff]
      %v881 = vld [vmem:[#allocation3 + $0x8] sm:$0xf]
      %884 = vrot.lane.b32.xlu0 %v880, 32
      %v885 = vpop.permute.xlu0 %884
      %886 = vrot.lane.b32.xlu0 %v881, 32
      %v887 = vpop.permute.xlu0 %886
      %v888 = vrot.slane %v885, 4
      %v889 = vrot.slane %v887, 4
      %v890 = vsel %vm551, %v888, %v889
      %vm891 = vcmask 261120
      %v892 = vsel %vm891, %v885, %v890
      %894 = vst [vmem:[#allocation6 + $0x10] sm:$0xff] %v892
      %v895 = vld [vmem:[#allocation3] sm:$0xff]
      %v896 = vld [vmem:[#allocation3 + $0x8] sm:$0xf]
      %897 = vrot.lane.b32.xlu0 %v579, 97
      %v898 = vpop.permute.xlu0 %897
      %v899 = vrot.slane %v898, 4
      %vm900 = vcmask 793600
      %v901 = vsel %vm900, %v899, %v898
      %vm902 = vcmp.ne.s16.totalorder %v901, 0
      %vm903 = vcmp.ne.s16.totalorder %v899, 0
      %v904 = vsel %vm902, %v895, 0
      %v905 = vsel %vm903, %v896, 0
      %908 = vrot.lane.b32.xlu0 %v904, 31
      %v909 = vpop.permute.xlu0 %908
      %910 = vrot.lane.b32.xlu0 %v905, 31
      %v911 = vpop.permute.xlu0 %910
      %v912 = vrot.slane %v909, 4
      %v913 = vrot.slane %v911, 4
      %v914 = vsel %vm551, %v912, %v913
      %vm915 = vcmask 252928
      %v916 = vsel %vm915, %v909, %v914
      %918 = vst [vmem:[#allocation6 + $0x18] sm:$0xff] %v916
      %v919 = vld [vmem:[#allocation3] sm:$0xff]
      %v920 = vld [vmem:[#allocation3 + $0x8] sm:$0xf]
      %v921 = vsel %vm399, 1, 0
      %v922 = vsel %vm400, 1, 0
      %vm923 = vcmp.eq.s32.totalorder %v921, 1
      %vm924 = vcmp.eq.s32.totalorder %v922, 1
      %vm925 = vmpackc.low %vm924, %vm923
      %v926 = vsel %vm925, 65537, 0
      %927 = vrot.lane.b32.xlu0 %v926, 98
      %v928 = vpop.permute.xlu0 %927
      %v929 = vrot.slane %v928, 4
      %vm930 = vcmask 801792
      %v931 = vsel %vm930, %v929, %v928
      %vm932 = vcmp.ne.s16.totalorder %v931, 0
      %vm933 = vcmp.ne.s16.totalorder %v929, 0
      %v934 = vsel %vm932, %v919, 0
      %v935 = vsel %vm933, %v920, 0
      %938 = vrot.lane.b32.xlu0 %v934, 30
      %v939 = vpop.permute.xlu0 %938
      %940 = vrot.lane.b32.xlu0 %v935, 30
      %v941 = vpop.permute.xlu0 %940
      %v942 = vrot.slane %v939, 4
      %v943 = vrot.slane %v941, 4
      %v944 = vsel %vm551, %v942, %v943
      %vm945 = vcmask 244736
      %v946 = vsel %vm945, %v939, %v944
      %948 = vst [vmem:[#allocation6 + $0x20] sm:$0xff] %v946
      %v949 = vld [vmem:[#allocation3] sm:$0xff]
      %v950 = vld [vmem:[#allocation3 + $0x8] sm:$0xf]
      %951 = vrot.lane.b32.xlu0 %v833, 110
      %v952 = vpop.permute.xlu0 %951
      %v953 = vrot.slane %v952, 4
      %vm954 = vcmask 900096
      %v955 = vsel %vm954, %v953, %v952
      %vm956 = vcmp.ne.s16.totalorder %v955, 0
      %vm957 = vcmp.ne.s16.totalorder %v953, 0
      %v958 = vsel %vm956, %v949, 0
      %v959 = vsel %vm957, %v950, 0
      %962 = vrot.lane.b32.xlu0 %v958, 18
      %v963 = vpop.permute.xlu0 %962
      %964 = vrot.lane.b32.xlu0 %v959, 18
      %v965 = vpop.permute.xlu0 %964
      %v966 = vrot.slane %v963, 4
      %v967 = vrot.slane %v965, 4
      %v968 = vsel %vm551, %v966, %v967
      %vm969 = vcmask 146432
      %v970 = vsel %vm969, %v963, %v968
      %972 = vst [vmem:[#allocation6 + $0x28] sm:$0xff] %v970
      %v973 = vld [vmem:[#allocation3] sm:$0xff]
      %v974 = vld [vmem:[#allocation3 + $0x8] sm:$0xf]
      %v975 = vsel %vm539, %v973, 0
      %v976 = vsel %vm540, %v974, 0
      %979 = vrot.lane.b32.xlu0 %v975, 17
      %v980 = vpop.permute.xlu0 %979
      %981 = vrot.lane.b32.xlu0 %v976, 17
      %v982 = vpop.permute.xlu0 %981
      %v983 = vrot.slane %v980, 4
      %v984 = vrot.slane %v982, 4
      %v985 = vsel %vm551, %v983, %v984
      %v986 = vsel %vm553, %v980, %v985
      %988 = vst [vmem:[#allocation6 + $0x30] sm:$0xff] %v986
      %v989 = vld [vmem:[#allocation3] sm:$0xff]
      %v990 = vld [vmem:[#allocation3 + $0x8] sm:$0xf]
      %993 = vrot.lane.b32.xlu0 %v989, 16
      %v994 = vpop.permute.xlu0 %993
      %995 = vrot.lane.b32.xlu0 %v990, 16
      %v996 = vpop.permute.xlu0 %995
      %v997 = vrot.slane %v994, 4
      %v998 = vrot.slane %v996, 4
      %v999 = vsel %vm551, %v997, %v998
      %v1000 = vsel %vm568, %v994, %v999
      %1002 = vst [vmem:[#allocation6 + $0x38] sm:$0xff] %v1000
      %v1003 = vld [vmem:[#allocation3] sm:$0xff]
      %v1004 = vld [vmem:[#allocation3 + $0x8] sm:$0xf]
      %v1005 = vsel %vm585, %v1003, 0
      %v1006 = vsel %vm586, %v1004, 0
      %1009 = vrot.lane.b32.xlu0 %v1005, 15
      %v1010 = vpop.permute.xlu0 %1009
      %1011 = vrot.lane.b32.xlu0 %v1006, 15
      %v1012 = vpop.permute.xlu0 %1011
      %v1013 = vrot.slane %v1010, 4
      %v1014 = vrot.slane %v1012, 4
      %v1015 = vsel %vm551, %v1013, %v1014
      %v1016 = vsel %vm598, %v1010, %v1015
      %1018 = vst [vmem:[#allocation6 + $0x40] sm:$0xff] %v1016
      %v1019 = vld [vmem:[#allocation3] sm:$0xff]
      %v1020 = vld [vmem:[#allocation3 + $0x8] sm:$0xf]
      %1021 = vrot.lane.b32.xlu0 %v926, 114
      %v1022 = vpop.permute.xlu0 %1021
      %v1023 = vrot.slane %v1022, 4
      %vm1024 = vcmask 932864
      %v1025 = vsel %vm1024, %v1023, %v1022
      %vm1026 = vcmp.ne.s16.totalorder %v1025, 0
      %vm1027 = vcmp.ne.s16.totalorder %v1023, 0
      %v1028 = vsel %vm1026, %v1019, 0
      %v1029 = vsel %vm1027, %v1020, 0
      %1032 = vrot.lane.b32.xlu0 %v1028, 14
      %v1033 = vpop.permute.xlu0 %1032
      %1034 = vrot.lane.b32.xlu0 %v1029, 14
      %v1035 = vpop.permute.xlu0 %1034
      %v1036 = vrot.slane %v1033, 4
      %v1037 = vrot.slane %v1035, 4
      %v1038 = vsel %vm551, %v1036, %v1037
      %vm1039 = vcmask 113664
      %v1040 = vsel %vm1039, %v1033, %v1038
      %1042 = vst [vmem:[#allocation6 + $0x48] sm:$0xff] %v1040
      %v1043 = vld [vmem:[#allocation3] sm:$0xff]
      %v1044 = vld [vmem:[#allocation3 + $0x8] sm:$0xf]
      %1045 = vrot.lane.b32.xlu0 %v833, 126
      %v1046 = vpop.permute.xlu0 %1045
      %v1047 = vrot.slane %v1046, 4
      %vm1048 = vcmask 1031168
      %v1049 = vsel %vm1048, %v1047, %v1046
      %vm1050 = vcmp.ne.s16.totalorder %v1049, 0
      %vm1051 = vcmp.ne.s16.totalorder %v1047, 0
      %v1052 = vsel %vm1050, %v1043, 0
      %v1053 = vsel %vm1051, %v1044, 0
      %1056 = vrot.lane.b32.xlu0 %v1052, 2
      %v1057 = vpop.permute.xlu0 %1056
      %1058 = vrot.lane.b32.xlu0 %v1053, 2
      %v1059 = vpop.permute.xlu0 %1058
      %v1060 = vrot.slane %v1057, 4
      %v1061 = vrot.slane %v1059, 4
      %v1062 = vsel %vm551, %v1060, %v1061
      %vm1063 = vcmask 15360
      %v1064 = vsel %vm1063, %v1057, %v1062
      %1066 = vst [vmem:[#allocation6 + $0x50] sm:$0xff] %v1064
      %v1067 = vld [vmem:[#allocation3] sm:$0xff]
      %v1068 = vld [vmem:[#allocation3 + $0x8] sm:$0xf]
      %v1069 = vsel %vm609, %v1067, 0
      %v1070 = vsel %vm610, %v1068, 0
      %1073 = vrot.lane.b32.xlu0 %v1069, 1
      %v1074 = vpop.permute.xlu0 %1073
      %1075 = vrot.lane.b32.xlu0 %v1070, 1
      %v1076 = vpop.permute.xlu0 %1075
      %v1077 = vrot.slane %v1074, 4
      %v1078 = vrot.slane %v1076, 4
      %v1079 = vsel %vm551, %v1077, %v1078
      %v1080 = vsel %vm622, %v1074, %v1079
      %1082 = vst [vmem:[#allocation6 + $0x58] sm:$0xff] %v1080
      %v1083 = vld [vmem:[#allocation3 + $0x4] sm:$0xff]
      %1084 = vst [vmem:[#allocation6 + $0x60] sm:$0xff] %v1083
      %v1085 = vld [vmem:[#allocation3 + $0x4] sm:$0xff]
      %v1086 = vld [vmem:[#allocation3 + $0xc] sm:$0xf]
      %v1087 = vsel %vm634, %v1085, 0
      %v1088 = vsel %vm635, %v1086, 0
      %1091 = vrot.lane.b32.xlu0 %v1087, 127
      %v1092 = vpop.permute.xlu0 %1091
      %1093 = vrot.lane.b32.xlu0 %v1088, 127
      %v1094 = vpop.permute.xlu0 %1093
      %v1095 = vrot.slane %v1092, 4
      %v1096 = vrot.slane %v1094, 4
      %v1097 = vsel %vm551, %v1095, %v1096
      %v1098 = vsel %vm607, %v1092, %v1097
      %1100 = vst [vmem:[#allocation6 + $0x68] sm:$0xff] %v1098
      %v1101 = vld [vmem:[#allocation3 + $0x4] sm:$0xff]
      %v1102 = vld [vmem:[#allocation3 + $0xc] sm:$0xf]
      %1103 = vrot.lane.b32.xlu0 %v926, 2
      %v1104 = vpop.permute.xlu0 %1103
      %v1105 = vrot.slane %v1104, 4
      %v1106 = vsel %vm1063, %v1105, %v1104
      %vm1107 = vcmp.ne.s16.totalorder %v1106, 0
      %vm1108 = vcmp.ne.s16.totalorder %v1105, 0
      %v1109 = vsel %vm1107, %v1101, 0
      %v1110 = vsel %vm1108, %v1102, 0
      %1113 = vrot.lane.b32.xlu0 %v1109, 126
      %v1114 = vpop.permute.xlu0 %1113
      %1115 = vrot.lane.b32.xlu0 %v1110, 126
      %v1116 = vpop.permute.xlu0 %1115
      %v1117 = vrot.slane %v1114, 4
      %v1118 = vrot.slane %v1116, 4
      %v1119 = vsel %vm551, %v1117, %v1118
      %v1120 = vsel %vm1048, %v1114, %v1119
      %1122 = vst [vmem:[#allocation6 + $0x70] sm:$0xff] %v1120
      %v1123 = vld [vmem:[#allocation3 + $0x4] sm:$0xff]
      %v1124 = vld [vmem:[#allocation3 + $0xc] sm:$0xf]
      %1125 = vrot.lane.b32.xlu0 %v833, 14
      %v1126 = vpop.permute.xlu0 %1125
      %v1127 = vrot.slane %v1126, 4
      %v1128 = vsel %vm1039, %v1127, %v1126
      %vm1129 = vcmp.ne.s16.totalorder %v1128, 0
      %vm1130 = vcmp.ne.s16.totalorder %v1127, 0
      %v1131 = vsel %vm1129, %v1123, 0
      %v1132 = vsel %vm1130, %v1124, 0
      %1135 = vrot.lane.b32.xlu0 %v1131, 114
      %v1136 = vpop.permute.xlu0 %1135
      %1137 = vrot.lane.b32.xlu0 %v1132, 114
      %v1138 = vpop.permute.xlu0 %1137
      %v1139 = vrot.slane %v1136, 4
      %v1140 = vrot.slane %v1138, 4
      %v1141 = vsel %vm551, %v1139, %v1140
      %v1142 = vsel %vm1024, %v1136, %v1141
      %1144 = vst [vmem:[#allocation6 + $0x78] sm:$0xff] %v1142
      %v1145 = vld [vmem:[#allocation3 + $0x4] sm:$0xff]
      %v1146 = vld [vmem:[#allocation3 + $0xc] sm:$0xf]
      %v1147 = vsel %vm656, %v1145, 0
      %v1148 = vsel %vm657, %v1146, 0
      %1151 = vrot.lane.b32.xlu0 %v1147, 113
      %v1152 = vpop.permute.xlu0 %1151
      %1153 = vrot.lane.b32.xlu0 %v1148, 113
      %v1154 = vpop.permute.xlu0 %1153
      %v1155 = vrot.slane %v1152, 4
      %v1156 = vrot.slane %v1154, 4
      %v1157 = vsel %vm551, %v1155, %v1156
      %v1158 = vsel %vm583, %v1152, %v1157
      %1160 = vst [vmem:[#allocation6 + $0x80] sm:$0xff] %v1158
      %v1161 = vld [vmem:[#allocation3 + $0x4] sm:$0xff]
      %v1162 = vld [vmem:[#allocation3 + $0xc] sm:$0xf]
      %1165 = vrot.lane.b32.xlu0 %v1161, 112
      %v1166 = vpop.permute.xlu0 %1165
      %1167 = vrot.lane.b32.xlu0 %v1162, 112
      %v1168 = vpop.permute.xlu0 %1167
      %v1169 = vrot.slane %v1166, 4
      %v1170 = vrot.slane %v1168, 4
      %v1171 = vsel %vm551, %v1169, %v1170
      %v1172 = vsel %vm683, %v1166, %v1171
      %1174 = vst [vmem:[#allocation6 + $0x88] sm:$0xff] %v1172
      %v1175 = vld [vmem:[#allocation3 + $0x4] sm:$0xff]
      %v1176 = vld [vmem:[#allocation3 + $0xc] sm:$0xf]
      %v1177 = vsel %vm693, %v1175, 0
      %v1178 = vsel %vm694, %v1176, 0
      %1181 = vrot.lane.b32.xlu0 %v1177, 111
      %v1182 = vpop.permute.xlu0 %1181
      %1183 = vrot.lane.b32.xlu0 %v1178, 111
      %v1184 = vpop.permute.xlu0 %1183
      %v1185 = vrot.slane %v1182, 4
      %v1186 = vrot.slane %v1184, 4
      %v1187 = vsel %vm551, %v1185, %v1186
      %v1188 = vsel %vm537, %v1182, %v1187
      %1190 = vst [vmem:[#allocation6 + $0x90] sm:$0xff] %v1188
      %v1191 = vld [vmem:[#allocation3 + $0x4] sm:$0xff]
      %v1192 = vld [vmem:[#allocation3 + $0xc] sm:$0xf]
      %1193 = vrot.lane.b32.xlu0 %v926, 18
      %v1194 = vpop.permute.xlu0 %1193
      %v1195 = vrot.slane %v1194, 4
      %v1196 = vsel %vm969, %v1195, %v1194
      %vm1197 = vcmp.ne.s16.totalorder %v1196, 0
      %vm1198 = vcmp.ne.s16.totalorder %v1195, 0
      %v1199 = vsel %vm1197, %v1191, 0
      %v1200 = vsel %vm1198, %v1192, 0
      %1203 = vrot.lane.b32.xlu0 %v1199, 110
      %v1204 = vpop.permute.xlu0 %1203
      %1205 = vrot.lane.b32.xlu0 %v1200, 110
      %v1206 = vpop.permute.xlu0 %1205
      %v1207 = vrot.slane %v1204, 4
      %v1208 = vrot.slane %v1206, 4
      %v1209 = vsel %vm551, %v1207, %v1208
      %v1210 = vsel %vm954, %v1204, %v1209
      %1212 = vst [vmem:[#allocation6 + $0x98] sm:$0xff] %v1210
      %v1213 = vld [vmem:[#allocation3 + $0x4] sm:$0xff]
      %v1214 = vld [vmem:[#allocation3 + $0xc] sm:$0xf]
      %1215 = vrot.lane.b32.xlu0 %v833, 30
      %v1216 = vpop.permute.xlu0 %1215
      %v1217 = vrot.slane %v1216, 4
      %v1218 = vsel %vm945, %v1217, %v1216
      %vm1219 = vcmp.ne.s16.totalorder %v1218, 0
      %vm1220 = vcmp.ne.s16.totalorder %v1217, 0
      %v1221 = vsel %vm1219, %v1213, 0
      %v1222 = vsel %vm1220, %v1214, 0
      %1225 = vrot.lane.b32.xlu0 %v1221, 98
      %v1226 = vpop.permute.xlu0 %1225
      %1227 = vrot.lane.b32.xlu0 %v1222, 98
      %v1228 = vpop.permute.xlu0 %1227
      %v1229 = vrot.slane %v1226, 4
      %v1230 = vrot.slane %v1228, 4
      %v1231 = vsel %vm551, %v1229, %v1230
      %v1232 = vsel %vm930, %v1226, %v1231
      %1234 = vst [vmem:[#allocation6 + $0xa0] sm:$0xff] %v1232
      %v1235 = vld [vmem:[#allocation3 + $0x4] sm:$0xff]
      %v1236 = vld [vmem:[#allocation3 + $0xc] sm:$0xf]
      %1237 = vrot.lane.b32.xlu0 %v533, 31
      %v1238 = vpop.permute.xlu0 %1237
      %v1239 = vrot.slane %v1238, 4
      %v1240 = vsel %vm915, %v1239, %v1238
      %vm1241 = vcmp.ne.s16.totalorder %v1240, 0
      %vm1242 = vcmp.ne.s16.totalorder %v1239, 0
      %v1243 = vsel %vm1241, %v1235, 0
      %v1244 = vsel %vm1242, %v1236, 0
      %1247 = vrot.lane.b32.xlu0 %v1243, 97
      %v1248 = vpop.permute.xlu0 %1247
      %1249 = vrot.lane.b32.xlu0 %v1244, 97
      %v1250 = vpop.permute.xlu0 %1249
      %v1251 = vrot.slane %v1248, 4
      %v1252 = vrot.slane %v1250, 4
      %v1253 = vsel %vm551, %v1251, %v1252
      %v1254 = vsel %vm900, %v1248, %v1253
      %1256 = vst [vmem:[#allocation6 + $0xa8] sm:$0xff] %v1254
      %v1257 = vld [vmem:[#allocation3 + $0x4] sm:$0xff]
      %v1258 = vld [vmem:[#allocation3 + $0xc] sm:$0xf]
      %1261 = vrot.lane.b32.xlu0 %v1257, 96
      %v1262 = vpop.permute.xlu0 %1261
      %1263 = vrot.lane.b32.xlu0 %v1258, 96
      %v1264 = vpop.permute.xlu0 %1263
      %v1265 = vrot.slane %v1262, 4
      %v1266 = vrot.slane %v1264, 4
      %v1267 = vsel %vm551, %v1265, %v1266
      %vm1268 = vcmask 785408
      %v1269 = vsel %vm1268, %v1262, %v1267
      %1271 = vst [vmem:[#allocation6 + $0xb0] sm:$0xff] %v1269
      %v1272 = vld [vmem:[#allocation3 + $0x4] sm:$0xff]
      %v1273 = vld [vmem:[#allocation3 + $0xc] sm:$0xf]
      %1274 = vrot.lane.b32.xlu0 %v579, 33
      %v1275 = vpop.permute.xlu0 %1274
      %v1276 = vrot.slane %v1275, 4
      %v1277 = vsel %vm876, %v1276, %v1275
      %vm1278 = vcmp.ne.s16.totalorder %v1277, 0
      %vm1279 = vcmp.ne.s16.totalorder %v1276, 0
      %v1280 = vsel %vm1278, %v1272, 0
      %v1281 = vsel %vm1279, %v1273, 0
      %1284 = vrot.lane.b32.xlu0 %v1280, 95
      %v1285 = vpop.permute.xlu0 %1284
      %1286 = vrot.lane.b32.xlu0 %v1281, 95
      %v1287 = vpop.permute.xlu0 %1286
      %v1288 = vrot.slane %v1285, 4
      %v1289 = vrot.slane %v1287, 4
      %v1290 = vsel %vm551, %v1288, %v1289
      %v1291 = vsel %vm861, %v1285, %v1290
      %1293 = vst [vmem:[#allocation6 + $0xb8] sm:$0xff] %v1291
      %v1294 = vld [vmem:[#allocation3 + $0x4] sm:$0xff]
      %v1295 = vld [vmem:[#allocation3 + $0xc] sm:$0xf]
      %1296 = vrot.lane.b32.xlu0 %v926, 34
      %v1297 = vpop.permute.xlu0 %1296
      %v1298 = vrot.slane %v1297, 4
      %v1299 = vsel %vm852, %v1298, %v1297
      %vm1300 = vcmp.ne.s16.totalorder %v1299, 0
      %vm1301 = vcmp.ne.s16.totalorder %v1298, 0
      %v1302 = vsel %vm1300, %v1294, 0
      %v1303 = vsel %vm1301, %v1295, 0
      %1306 = vrot.lane.b32.xlu0 %v1302, 94
      %v1307 = vpop.permute.xlu0 %1306
      %1308 = vrot.lane.b32.xlu0 %v1303, 94
      %v1309 = vpop.permute.xlu0 %1308
      %v1310 = vrot.slane %v1307, 4
      %v1311 = vrot.slane %v1309, 4
      %v1312 = vsel %vm551, %v1310, %v1311
      %v1313 = vsel %vm837, %v1307, %v1312
      %1315 = vst [vmem:[#allocation6 + $0xc0] sm:$0xff] %v1313
      %v1316 = vld [vmem:[%s5] sm:$0xff]
      %v1317 = vld [vmem:[#allocation6] sm:$0xff]
      %v1318 = vld [vmem:[#allocation6 + $0x8] sm:$0xff]
      %v1319 = vld [vmem:[#allocation6 + $0x10] sm:$0xff]
      %v1320 = vld [vmem:[#allocation6 + $0x18] sm:$0xff]
      %v1321 = vld [vmem:[#allocation6 + $0x20] sm:$0xff]
      %v1322 = vld [vmem:[#allocation6 + $0x28] sm:$0xff]
      %v1323 = vld [vmem:[#allocation6 + $0x30] sm:$0xff]
      %v1324 = vld [vmem:[#allocation6 + $0x38] sm:$0xff]
      %v1325 = vld [vmem:[#allocation6 + $0x40] sm:$0xff]
      %v1326 = vld [vmem:[#allocation6 + $0x48] sm:$0xff]
      %v1327 = vld [vmem:[#allocation6 + $0x50] sm:$0xff]
      %v1328 = vld [vmem:[#allocation6 + $0x58] sm:$0xff]
      %v1329 = vld [vmem:[#allocation6 + $0x60] sm:$0xff]
      %v1330 = vld [vmem:[#allocation6 + $0x68] sm:$0xff]
      %v1331 = vld [vmem:[#allocation6 + $0x70] sm:$0xff]
      %v1332 = vld [vmem:[#allocation6 + $0x78] sm:$0xff]
      %v1333 = vld [vmem:[#allocation6 + $0x80] sm:$0xff]
      %v1334 = vld [vmem:[#allocation6 + $0x88] sm:$0xff]
      %v1335 = vld [vmem:[#allocation6 + $0x90] sm:$0xff]
      %v1336 = vld [vmem:[#allocation6 + $0x98] sm:$0xff]
      %v1337 = vld [vmem:[#allocation6 + $0xa0] sm:$0xff]
      %v1338 = vld [vmem:[#allocation6 + $0xa8] sm:$0xff]
      %v1339 = vld [vmem:[#allocation6 + $0xb0] sm:$0xff]
      %v1340 = vld [vmem:[#allocation6 + $0xb8] sm:$0xff]
      %v1341 = vld [vmem:[#allocation6 + $0xc0] sm:$0xff]
      %v1342 = vld [vmem:[%s6] sm:$0xff]
      %1344 = vset.pattern.permute.xlu0 0
      %1345 = vperm.xlu0 %1344, %v1342
      %v1346 = vpop.permute.xlu0 %1345
      %v1349 = vunpack.c.l.b16 %v1316
      %v1350 = vunpack.c.h.b16 %v1316
      %v1351 = vpack.c.b16 %v1349, %v1349
      %v1352 = vpack.c.b16 %v1350, %v1350
      %v1379 = vunpack.c.l.b16 %v1317
      %v1380 = vunpack.c.h.b16 %v1317
      %v1381 = vunpack.c.l.b16 %v1318
      %v1382 = vunpack.c.h.b16 %v1318
      %v1383 = vunpack.c.l.b16 %v1319
      %v1384 = vunpack.c.h.b16 %v1319
      %v1385 = vunpack.c.l.b16 %v1320
      %v1386 = vunpack.c.h.b16 %v1320
      %v1387 = vunpack.c.l.b16 %v1321
      %v1388 = vunpack.c.h.b16 %v1321
      %v1389 = vunpack.c.l.b16 %v1322
      %v1390 = vunpack.c.h.b16 %v1322
      %v1391 = vunpack.c.l.b16 %v1323
      %v1392 = vunpack.c.h.b16 %v1323
      %v1393 = vunpack.c.l.b16 %v1324
      %v1394 = vunpack.c.h.b16 %v1324
      %v1395 = vunpack.c.l.b16 %v1325
      %v1396 = vunpack.c.h.b16 %v1325
      %v1397 = vunpack.c.l.b16 %v1326
      %v1398 = vunpack.c.h.b16 %v1326
      %v1399 = vunpack.c.l.b16 %v1327
      %v1400 = vunpack.c.h.b16 %v1327
      %v1401 = vunpack.c.l.b16 %v1328
      %v1402 = vunpack.c.h.b16 %v1328
      %v1403 = vunpack.c.l.b16 %v1329
      %v1404 = vunpack.c.h.b16 %v1329
      %v1405 = vunpack.c.l.b16 %v1330
      %v1406 = vunpack.c.h.b16 %v1330
      %v1407 = vunpack.c.l.b16 %v1331
      %v1408 = vunpack.c.h.b16 %v1331
      %v1409 = vunpack.c.l.b16 %v1332
      %v1410 = vunpack.c.h.b16 %v1332
      %v1411 = vunpack.c.l.b16 %v1333
      %v1412 = vunpack.c.h.b16 %v1333
      %v1413 = vunpack.c.l.b16 %v1334
      %v1414 = vunpack.c.h.b16 %v1334
      %v1415 = vunpack.c.l.b16 %v1335
      %v1416 = vunpack.c.h.b16 %v1335
      %v1417 = vunpack.c.l.b16 %v1336
      %v1418 = vunpack.c.h.b16 %v1336
      %v1419 = vunpack.c.l.b16 %v1337
      %v1420 = vunpack.c.h.b16 %v1337
      %v1421 = vunpack.c.l.b16 %v1338
      %v1422 = vunpack.c.h.b16 %v1338
      %v1423 = vunpack.c.l.b16 %v1339
      %v1424 = vunpack.c.h.b16 %v1339
      %v1425 = vunpack.c.l.b16 %v1340
      %v1426 = vunpack.c.h.b16 %v1340
      %v1427 = vunpack.c.l.b16 %v1341
      %v1428 = vunpack.c.h.b16 %v1341
      %v1429 = vpack.c.b16 %v1381, %v1379
      %v1430 = vpack.c.b16 %v1382, %v1380
      %v1431 = vpack.c.b16 %v1385, %v1383
      %v1432 = vpack.c.b16 %v1386, %v1384
      %v1433 = vpack.c.b16 %v1389, %v1387
      %v1434 = vpack.c.b16 %v1390, %v1388
      %v1435 = vpack.c.b16 %v1393, %v1391
      %v1436 = vpack.c.b16 %v1394, %v1392
      %v1437 = vpack.c.b16 %v1397, %v1395
      %v1438 = vpack.c.b16 %v1398, %v1396
      %v1439 = vpack.c.b16 %v1401, %v1399
      %v1440 = vpack.c.b16 %v1402, %v1400
      %v1441 = vpack.c.b16 %v1405, %v1403
      %v1442 = vpack.c.b16 %v1406, %v1404
      %v1443 = vpack.c.b16 %v1409, %v1407
      %v1444 = vpack.c.b16 %v1410, %v1408
      %v1445 = vpack.c.b16 %v1413, %v1411
      %v1446 = vpack.c.b16 %v1414, %v1412
      %v1447 = vpack.c.b16 %v1417, %v1415
      %v1448 = vpack.c.b16 %v1418, %v1416
      %v1449 = vpack.c.b16 %v1421, %v1419
      %v1450 = vpack.c.b16 %v1422, %v1420
      %v1451 = vpack.c.b16 %v1425, %v1423
      %v1452 = vpack.c.b16 %v1426, %v1424
      %v1453 = vpack.c.b16 %v1427, %v1427
      %v1454 = vpack.c.b16 %v1428, %v1428
      %v1480 = vsel %vm770, %v1352, 0
      %v1483 = vsel %vm774, %v1453, 0
      %v1486 = vsel %vm774, %v1454, 0
      %1488 = vmatprep.subr.bf16.mxu0 %v1430
      %1489 = vmatpush1.bf16.msra.mxu0 %v1429
      %1490 = vmatprep.subr.bf16.mxu0 %v1432
      %1491 = vmatpush1.bf16.msra.mxu0 %v1431
      %1492 = vmatprep.subr.bf16.mxu0 %v1434
      %1493 = vmatpush1.bf16.msra.mxu0 %v1433
      %1494 = vmatprep.subr.bf16.mxu0 %v1436
      %1495 = vmatpush1.bf16.msra.mxu0 %v1435
      %1496 = vmatprep.subr.bf16.mxu0 %v1438
      %1497 = vmatpush1.bf16.msra.mxu0 %v1437
      %1498 = vmatprep.subr.bf16.mxu0 %v1440
      %1499 = vmatpush1.bf16.msra.mxu0 %v1439
      %1500 = vmatprep.subr.bf16.mxu0 %v1442
      %1501 = vmatpush1.bf16.msra.mxu0 %v1441
      %1502 = vmatprep.subr.bf16.mxu0 %v1444
      %1503 = vmatpush1.bf16.msra.mxu0 %v1443
      %1504 = vmatprep.subr.bf16.mxu0 %v1446
      %1505 = vmatpush1.bf16.msra.mxu0 %v1445
      %1506 = vmatprep.subr.bf16.mxu0 %v1448
      %1507 = vmatpush1.bf16.msra.mxu0 %v1447
      %1508 = vmatprep.subr.bf16.mxu0 %v1450
      %1509 = vmatpush1.bf16.msra.mxu0 %v1449
      %1510 = vmatprep.subr.bf16.mxu0 %v1452
      %1511 = vmatpush1.bf16.msra.mxu0 %v1451
      %1512 = vmatprep.subr.bf16.mxu0 %v1486
      %1513 = vmatpush1.bf16.msra.mxu0 %v1483
      %1514 = vmatprep.subr.bf16.mxu0 0
      %1515 = vmatpush1.bf16.msra.mxu0 0
      %1516 = vmatprep.subr.bf16.mxu0 0
      %1517 = vmatpush1.bf16.msra.mxu0 0
      %1518 = vmatprep.subr.bf16.mxu0 0
      %1519 = vmatpush1.bf16.msra.mxu0 0
      %1520 = vmatprep.mubr.bf16.mxu0 %v1480
      %1521 = vmatmul.mubr.bf16.gmra.mrb[0].mxu0 %v1351
      %v1522 = vpop.f32.mrb[0].mxu0
      %v1523 = vadd.f32 %v1346, %v1522
      %v1524 = vpop.f32.mrb[0].mxu0
      %v1525 = vadd.f32 %v1346, %v1524
      %v1526 = vpop.f32.mrb[0].mxu0
      %v1527 = vpop.f32.mrb[0].mxu0
      %1528 = vdwg.mxu0
      %v1529 = vmax.f32 %v1523, 0.0
      %v1530 = vmax.f32 %v1525, 0.0
      %1531 = vst [vmem:[%s332 + $0x20] sm:$0xff] %v1529
      %1532 = vst [vmem:[%s332 + $0x28] sm:$0xff] %v1530
      %v1533 = vld [vmem:[#allocation4] sm:$0xff]
      %v1534 = vld [vmem:[#allocation4 + $0x8] sm:$0xf]
      %v1537 = vcombine.high %v1533, %v1533
      %1538 = vrot.lane.b32.xlu0 %v1533, 1
      %v1539 = vpop.permute.xlu0 %1538
      %1540 = vrot.lane.b32.xlu0 %v1537, 1
      %v1541 = vpop.permute.xlu0 %1540
      %1542 = vrot.lane.b32.xlu0 %v1534, 1
      %v1543 = vpop.permute.xlu0 %1542
      %vm1544 = vcmask 7168
      %v1545 = vsel %vm1544, %v1539, %v1541
      %v1546 = vsel %vm1544, %v1541, %v1543
      %v1549 = vsel %vm530, %v1545, -inf
      %v1550 = vsel %vm531, %v1546, -inf
      %v1551 = vld [vmem:[#allocation4 + $0x4] sm:$0xff]
      %v1552 = vld [vmem:[#allocation4 + $0xc] sm:$0xf]
      %v1555 = vcombine.high %v1551, %v1551
      %1556 = vrot.lane.b32.xlu0 %v1551, 127
      %v1557 = vpop.permute.xlu0 %1556
      %1558 = vrot.lane.b32.xlu0 %v1555, 127
      %v1559 = vpop.permute.xlu0 %1558
      %1560 = vrot.lane.b32.xlu0 %v1552, 127
      %v1561 = vpop.permute.xlu0 %1560
      %vm1562 = vcmask 1039360
      %v1563 = vsel %vm1562, %v1557, %v1559
      %v1564 = vsel %vm1562, %v1559, %v1561
      %v1567 = vsel %vm576, %v1563, -inf
      %v1568 = vsel %vm577, %v1564, -inf
      %v1569 = vmax.f32 %v1549, %v1567
      %v1570 = vmax.f32 %v1550, %v1568
      %v1573 = vcombine.low %v1569, %v1570
      %v1575 = vmax.f32 %v336, %v1573
      %1576 = vst [vmem:[#allocation4 + $0x4] sm:$0xff] %v1575
      %v1577 = vld [vmem:[#allocation4] sm:$0xff]
      %v1578 = vld [vmem:[#allocation4 + $0x8] sm:$0xf]
      %v1579 = vld [vmem:[#allocation4 + $0x4] sm:$0xff]
      %v1580 = vld [vmem:[#allocation4 + $0xc] sm:$0xf]
      %1583 = vrot.lane.b32.xlu0 %v1579, 96
      %v1584 = vpop.permute.xlu0 %1583
      %1585 = vrot.lane.b32.xlu0 %v1580, 96
      %v1586 = vpop.permute.xlu0 %1585
      %v1587 = vrot.slane %v1584, 4
      %vm1588 = vcmask 785408
      %v1589 = vsel %vm1588, %v1587, %v1584
      %v1590 = vsel %vm1588, %v1587, %v1586
      %v1593 = vmax.f32 %v1577, %v1589
      %v1594 = vmax.f32 %v1578, %v1590
      %1597 = vrot.lane.b32.xlu0 %v1593, 16
      %v1598 = vpop.permute.xlu0 %1597
      %1599 = vrot.lane.b32.xlu0 %v1594, 16
      %v1600 = vpop.permute.xlu0 %1599
      %v1601 = vrot.slane %v1598, 4
      %v1602 = vrot.slane %v1600, 4
      %v1603 = vsel %vm774, %v1601, %v1602
      %vm1604 = vcmask 130048
      %v1605 = vsel %vm1604, %v1598, %v1603
      %v1607 = vmax.f32 %v1575, %v1605
      %v1608 = vld [vmem:[%s7] sm:$0xf]
      %v1610 = vcombine.high %v1607, %v1607
      %v1612 = vpack.c.bf16 %v1607, %v1607
      %v1613 = vpack.c.bf16 %v1610, %v1610
      %v1614 = vld [vmem:[%s8] sm:$0xff]
      %1616 = vset.pattern.permute.xlu0 0
      %1617 = vperm.xlu0 %1616, %v1614
      %v1618 = vpop.permute.xlu0 %1617
      %v1621 = vsel %vm436, %v1608, 0
      %v1624 = vsel %vm443, %v1612, 0
      %v1627 = vsel %vm443, %v1613, 0
      %1629 = vmatprep.subr.bf16.mxu0 %v1627
      %1630 = vmatpush1.bf16.msra.mxu0 %v1624
      %1631 = vmatprep.subr.bf16.mxu0 0
      %1632 = vmatpush1.bf16.msra.mxu0 0
      %1633 = vmatprep.subr.bf16.mxu0 0
      %1634 = vmatpush1.bf16.msra.mxu0 0
      %1635 = vmatprep.subr.bf16.mxu0 0
      %1636 = vmatpush1.bf16.msra.mxu0 0
      %1637 = vmatprep.subr.bf16.mxu0 0
      %1638 = vmatpush1.bf16.msra.mxu0 0
      %1639 = vmatprep.subr.bf16.mxu0 0
      %1640 = vmatpush1.bf16.msra.mxu0 0
      %1641 = vmatprep.subr.bf16.mxu0 0
      %1642 = vmatpush1.bf16.msra.mxu0 0
      %1643 = vmatprep.subr.bf16.mxu0 0
      %1644 = vmatpush1.bf16.msra.mxu0 0
      %1645 = vmatprep.subr.bf16.mxu0 0
      %1646 = vmatpush1.bf16.msra.mxu0 0
      %1647 = vmatprep.subr.bf16.mxu0 0
      %1648 = vmatpush1.bf16.msra.mxu0 0
      %1649 = vmatprep.subr.bf16.mxu0 0
      %1650 = vmatpush1.bf16.msra.mxu0 0
      %1651 = vmatprep.subr.bf16.mxu0 0
      %1652 = vmatpush1.bf16.msra.mxu0 0
      %1653 = vmatprep.subr.bf16.mxu0 0
      %1654 = vmatpush1.bf16.msra.mxu0 0
      %1655 = vmatprep.subr.bf16.mxu0 0
      %1656 = vmatpush1.bf16.msra.mxu0 0
      %1657 = vmatprep.subr.bf16.mxu0 0
      %1658 = vmatpush1.bf16.msra.mxu0 0
      %1659 = vmatprep.subr.bf16.mxu0 0
      %1660 = vmatpush1.bf16.msra.mxu0 0
      %1661 = vmatprep.mubr.bf16.mxu0 0
      %1662 = vmatmul.mubr.bf16.gmra.mrb[0].mxu0 %v1621
      %v1663 = vpop.f32.mrb[0].mxu0
      %v1664 = vadd.f32 %v1618, %v1663
      %v1665 = vpop.f32.mrb[0].mxu0
      %v1666 = vadd.f32 %v1618, %v1665
      %v1667 = vpop.f32.mrb[0].mxu0
      %v1668 = vpop.f32.mrb[0].mxu0
      %1669 = vdwg.mxu0
      %v1670 = vmax.f32 %v1664, 0.0
      %v1671 = vmax.f32 %v1666, 0.0
      %1672 = vst [vmem:[%s332 + $0x30] sm:$0xff] %v1670
      %1673 = vst [vmem:[%s332 + $0x38] sm:$0xff] %v1671
      %p1674 = scmp.lt.s32.totalorder %s20, 1
      %s1675 = scalar_select %p1674, %s20, 1
      %s1676 = smul.addr %s1675, 8
      %s1677 = smul.addr %s1676, 8
      %s1678 = scalar_lea.vmem %s9, %s1677
      // Predicated region
      $region57: #{inception_forward.1} parent=55 // pred_check
        %p1679 = pneg %p232
      $region58: #{inception_forward.1} parent=55 // pred_check_branch
        %1681 = sbr.rel (%p1679) target = $region60
      $region59: #{inception_forward.1} parent=55 // pred_region
        _
      $region60: #{inception_forward.1} parent=55 // pred_fallthru
        _
    $region56: #{inception_forward.1} parent=5 // pred_fallthru
      _
    %p1682 = scmp.le.s32.totalorder 2, %s15
    // Predicated region
    $region61: #{inception_forward.1} parent=5 // pred_check
      %p1683 = pneg %p1682
    $region62: #{inception_forward.1} parent=5 // pred_check_branch
      %1685 = sbr.rel (%p1683) target = $region64
    $region63: #{inception_forward.1} parent=5 // pred_region
      %s1686 = ssub.s32 %s15, 2
      // Predicated region
      $region65: #{inception_forward.1} parent=63 // pred_check
        %p1687 = pneg %p238
      $region66: #{inception_forward.1} parent=63 // pred_check_branch
        %1689 = sbr.rel (%p1687) target = $region68
      $region67: #{inception_forward.1} parent=63 // pred_region
        %p1690 = scmp.lt.s32.totalorder %s21, 1
        %s1691 = scalar_select %p1690, %s21, 1
        %s1692 = smul.addr %s1691, 8
        %s1693 = smul.addr %s1692, 8
        %s1694 = scalar_lea.vmem %s9, %s1693
      $region68: #{inception_forward.1} parent=63 // pred_fallthru
        _
    $region64: #{inception_forward.1} parent=5 // pred_fallthru
      _
  $region6: #{inception_forward.1} parent=0 // loop_footer
    %s19 = sadd.s32 1, %s15
  $region7: #{inception_forward.1} parent=0 // loop_footer_branch
    %14 = sbr.rel target = $region3
  $region8: #{inception_forward.1} parent=0 // loop_exit
    _

</llo_original>
